<compile_context>
chip_gen: v5e
topology: v5e:2x2
jax: 0.10.0
libtpu: 0.0.40
codegen_flags: <defaults>
</compile_context>

<pallas_src>
import jax
import jax.numpy as jnp
from jax.experimental import pallas as pl
from jax.experimental.pallas import tpu as pltpu


def _round_up(v, m):
    return (v + m - 1) // m * m


def _cdiv(a, b):
    return -(-a // b)


def _mtcnn_kernel(taps_ref, wexp_ref, f1w_ref, hw1_ref, hw2_ref, consts_ref,
                  out_ref):
    F = f1w_ref.shape[0]
    H = f1w_ref.shape[1]
    NH1p = hw1_ref.shape[1]
    DOUT = hw2_ref.shape[1]

    # Conv1d(1->C,k=3,pad=1) + conv bias + folded eval-mode BN at every even and
    # odd spatial position as ONE MXU matmul: [ye | yo] = taps @ w_exp.
    y = jnp.dot(taps_ref[...], wexp_ref[...],
                preferred_element_type=jnp.float32)            # (BT, 2F)
    # ReLU then MaxPool1d(2): relu(max(ye, yo)) == max(relu(ye), relu(yo)).
    pooled = jnp.maximum(jnp.maximum(y[:, :F], y[:, F:]), 0.0)  # (BT, F)

    # Packed biases (one sublane-aligned constant block).
    f1b = consts_ref[0:1, :H]
    hb1 = consts_ref[1:2, :NH1p]
    hb2 = consts_ref[2:3, :DOUT]

    # shared_fc: (BT, F) x (F, H) MXU matmul + bias + ReLU.
    shared = jnp.dot(pooled.astype(f1w_ref.dtype), f1w_ref[...],
                     preferred_element_type=jnp.float32) + f1b
    shared = jnp.maximum(shared, 0.0)                           # (BT, H)

    # Fused task heads: Linear(H, 64*T) + ReLU, then block-diagonal second layer.
    hh = jnp.dot(shared.astype(hw1_ref.dtype), hw1_ref[...],
                 preferred_element_type=jnp.float32) + hb1
    hh = jnp.maximum(hh, 0.0)
    heads = jnp.dot(hh.astype(hw2_ref.dtype), hw2_ref[...],
                    preferred_element_type=jnp.float32) + hb2   # (BT, DOUT)

    # Single lane-dense output slab: [ shared | all head outputs ].
    out_ref[:, :H] = shared.astype(out_ref.dtype)
    out_ref[:, H:] = heads.astype(out_ref.dtype)


def init_params(key, L, C=64, H=128, out_dims=(3, 5)):
    """Deterministic synthetic parameters in PyTorch weight layouts."""
    Lp = L // 2
    F = C * Lp
    keys = jax.random.split(key, 6 + len(out_dims))
    p = {}
    p["conv_w"] = 0.2 * jax.random.normal(keys[0], (C, 1, 3), jnp.float32)   # (out, in, k)
    p["conv_b"] = 0.1 * jax.random.normal(keys[1], (C,), jnp.float32)
    p["bn_gamma"] = 1.0 + 0.1 * jax.random.normal(keys[2], (C,), jnp.float32)
    p["bn_beta"] = 0.1 * jax.random.normal(keys[3], (C,), jnp.float32)
    p["bn_mean"] = jnp.zeros((C,), jnp.float32)    # untrained running stats
    p["bn_var"] = jnp.ones((C,), jnp.float32)
    p["fc1_w"] = 0.05 * jax.random.normal(keys[4], (H, F), jnp.float32)      # (out, in)
    p["fc1_b"] = 0.05 * jax.random.normal(keys[5], (H,), jnp.float32)
    heads = []
    for i, d in enumerate(out_dims):
        k1, k2, k3, k4 = jax.random.split(keys[6 + i], 4)
        heads.append(dict(
            w1=0.1 * jax.random.normal(k1, (64, H), jnp.float32),
            b1=0.05 * jax.random.normal(k2, (64,), jnp.float32),
            w2=0.1 * jax.random.normal(k3, (d, 64), jnp.float32),
            b2=0.05 * jax.random.normal(k4, (d,), jnp.float32)))
    p["heads"] = heads
    return p


def mtcnn_forward(x, params, reg_list, out_dims, C=64, H=128,
                  mxu_dtype=jnp.bfloat16, out_dtype=jnp.float32,
                  preferred_batch_tile=256):
    B, L = x.shape
    Lp = L // 2
    F = C * Lp
    T = len(out_dims)
    eps = 1e-5
    f32 = jnp.float32

    # ---- batch tiling: multiple of 8 sublanes; >= 2 grid steps whenever B > 8
    # so the "parallel" grid axis can shard across both v7x TensorCores. ----
    Bp8 = _round_up(B, 8)
    BT = min(preferred_batch_tile, max(8, _round_up(_cdiv(Bp8, 2), 8)))
    Bpad = _round_up(B, BT)
    nb = Bpad // BT

    # ---- compact tap slab: 4 unique shifted taps (each (Bpad, Lp)) plus a
    # ones column that carries the folded conv-bias / BN-shift through the MXU
    # matmul; lane-padded to a multiple of 128. ----
    xb = jnp.zeros((Bpad, L), f32).at[:B].set(x.astype(f32))
    xpad = jnp.pad(xb, ((0, 0), (1, 1)))              # Conv1d zero padding=1
    xe_m1 = xpad[:, 0:2 * Lp:2]                       # x[2m-1]
    xe_c = xpad[:, 1:2 * Lp + 1:2]                    # x[2m]
    xe_p1 = xpad[:, 2:2 * Lp + 2:2]                   # x[2m+1]
    xo_p1 = xpad[:, 3:2 * Lp + 3:2]                   # x[2m+2]
    K = 4 * Lp + 1
    Kp = _round_up(K, 128)
    taps = jnp.concatenate(
        [xe_m1, xe_c, xe_p1, xo_p1,
         jnp.ones((Bpad, 1), f32),
         jnp.zeros((Bpad, Kp - K), f32)], axis=1).astype(mxu_dtype)   # (Bpad, Kp)

    # ---- conv/BN expansion weight: taps @ w_exp == [ye | yo].  BN scale is
    # folded into the tap weights; conv bias + BN shift ride on the ones row.
    # Columns are position-major (m*C + c), matching the fc1 permutation. ----
    wk = params["conv_w"][:, 0, :]                                   # (C, 3)
    scale = params["bn_gamma"] / jnp.sqrt(params["bn_var"] + eps)
    shift = params["bn_beta"] - params["bn_mean"] * scale
    w0, w1, w2 = wk[:, 0] * scale, wk[:, 1] * scale, wk[:, 2] * scale
    bias_eff = params["conv_b"] * scale + shift

    eye = jnp.eye(Lp, dtype=f32)

    def tap_block(wvec):
        # (Lp, F): row m carries wvec[c] at column m*C + c.
        return jnp.einsum("mk,c->mkc", eye, wvec).reshape(Lp, F)

    ye_w = jnp.zeros((Kp, F), f32)
    ye_w = ye_w.at[0 * Lp:1 * Lp].set(tap_block(w0))    # tap x[2m-1]
    ye_w = ye_w.at[1 * Lp:2 * Lp].set(tap_block(w1))    # tap x[2m]
    ye_w = ye_w.at[2 * Lp:3 * Lp].set(tap_block(w2))    # tap x[2m+1]
    ye_w = ye_w.at[4 * Lp].set(jnp.tile(bias_eff, Lp))  # ones row
    yo_w = jnp.zeros((Kp, F), f32)
    yo_w = yo_w.at[1 * Lp:2 * Lp].set(tap_block(w0))    # tap x[2m]
    yo_w = yo_w.at[2 * Lp:3 * Lp].set(tap_block(w1))    # tap x[2m+1]
    yo_w = yo_w.at[3 * Lp:4 * Lp].set(tap_block(w2))    # tap x[2m+2]
    yo_w = yo_w.at[4 * Lp].set(jnp.tile(bias_eff, Lp))  # ones row
    w_exp = jnp.concatenate([ye_w, yo_w], axis=1).astype(mxu_dtype)   # (Kp, 2F)

    # ---- shared_fc weight: permute torch channel-major flatten (c*Lp + m) to
    # the kernel's position-major (m*C + c). ----
    f1w = (params["fc1_w"].reshape(H, C, Lp).transpose(0, 2, 1)
           .reshape(H, F).T).astype(mxu_dtype)                        # (F, H)

    # ---- fused task heads: concat first layers; block-diagonal, lane-padded
    # second layer. ----
    NH1 = 64 * T
    NH1p = _round_up(max(NH1, 128), 128)
    Dtot = int(sum(int(d) for d in out_dims))
    DOUT = _round_up(max(Dtot, 128), 128)
    hw1 = jnp.zeros((H, NH1p), f32)
    hb1 = jnp.zeros((NH1p,), f32)
    hw2 = jnp.zeros((NH1p, DOUT), f32)
    hb2 = jnp.zeros((DOUT,), f32)
    off = 0
    for t, hp in enumerate(params["heads"]):
        d = int(out_dims[t])
        hw1 = hw1.at[:, 64 * t:64 * (t + 1)].set(hp["w1"].T)
        hb1 = hb1.at[64 * t:64 * (t + 1)].set(hp["b1"])
        hw2 = hw2.at[64 * t:64 * (t + 1), off:off + d].set(hp["w2"].T)
        hb2 = hb2.at[off:off + d].set(hp["b2"])
        off += d
    hw1 = hw1.astype(mxu_dtype)
    hw2 = hw2.astype(mxu_dtype)

    # ---- pack remaining small biases into one sublane-aligned constant. ----
    CW = max(H, NH1p, DOUT)
    consts = jnp.zeros((8, CW), f32)
    consts = consts.at[0, :H].set(params["fc1_b"].astype(f32))
    consts = consts.at[1, :NH1p].set(hb1)
    consts = consts.at[2, :DOUT].set(hb2)

    OUTW = H + DOUT
    grid_spec = pltpu.PrefetchScalarGridSpec(
        num_scalar_prefetch=0,
        grid=(nb,),
        in_specs=[
            pl.BlockSpec((BT, Kp), lambda i: (i, 0)),        # compact taps (batch-tiled)
            pl.BlockSpec((Kp, 2 * F), lambda i: (0, 0)),     # conv+BN expansion weight
            pl.BlockSpec((F, H), lambda i: (0, 0)),          # shared_fc weight
            pl.BlockSpec((H, NH1p), lambda i: (0, 0)),       # fused head L1 weight
            pl.BlockSpec((NH1p, DOUT), lambda i: (0, 0)),    # block-diag head L2 weight
            pl.BlockSpec((8, CW), lambda i: (0, 0)),         # packed biases
        ],
        out_specs=pl.BlockSpec((BT, OUTW), lambda i: (i, 0)),
    )

    out_slab = pl.pallas_call(
        _mtcnn_kernel,
        out_shape=jax.ShapeDtypeStruct((Bpad, OUTW), out_dtype),
        grid_spec=grid_spec,
        compiler_params=pltpu.CompilerParams(
            dimension_semantics=("parallel",)),
    )(taps, w_exp, f1w, hw1, hw2, consts)

    # NOTE: rows [B:Bpad] of out_slab are padding garbage (the folded bias/BN
    # shift survives the ReLU); only the [:B] slices below are valid.
    shared = out_slab[:B, :H].astype(jnp.float32)
    outputs = {}
    off = H
    for reg, d in zip(reg_list, out_dims):
        outputs[reg] = out_slab[:B, off:off + int(d)].astype(jnp.float32)
        off += int(d)
    return outputs, shared


def reference_forward(x, params, reg_list, out_dims, C=64, H=128):
    """Plain-JAX replica of the PyTorch forward (eval-mode BN), for checking."""
    B, L = x.shape
    Lp = L // 2
    eps = 1e-5
    xp = jnp.pad(x, ((0, 0), (1, 1)))
    patches = jnp.stack([xp[:, l:l + 3] for l in range(L)], axis=1)   # (B, L, 3)
    conv = (jnp.einsum("blk,ck->bcl", patches, params["conv_w"][:, 0, :])
            + params["conv_b"][None, :, None])
    scale = params["bn_gamma"] / jnp.sqrt(params["bn_var"] + eps)
    shift = params["bn_beta"] - params["bn_mean"] * scale
    y = jnp.maximum(conv * scale[None, :, None] + shift[None, :, None], 0.0)
    pooled = jnp.max(y.reshape(B, C, Lp, 2), axis=-1)                 # (B, C, Lp)
    flat = pooled.reshape(B, C * Lp)                                  # channel-major
    h = jnp.maximum(flat @ params["fc1_w"].T + params["fc1_b"], 0.0)
    outs = {}
    for reg, hp in zip(reg_list, params["heads"]):
        hh = jnp.maximum(h @ hp["w1"].T + hp["b1"], 0.0)
        outs[reg] = hh @ hp["w2"].T + hp["b2"]
    return outs, h


if __name__ == "__main__":
    B, L, C, H = 4, 32, 64, 128   # input_dim=32, conv_layers=[(64,3,1,1)], hidden_dim=128
    out_dims = (3, 5)
    reg_list = ("reg_a", "reg_b")

    key = jax.random.PRNGKey(0)
    kx, kp = jax.random.split(key)
    x = jax.random.normal(kx, (B, L), jnp.float32)
    params = init_params(kp, L, C=C, H=H, out_dims=out_dims)

    ref_outputs, ref_shared = reference_forward(x, params, reg_list, out_dims, C=C, H=H)

    # f32 MXU operands + f32 output slab: verification path.
    outputs, shared = mtcnn_forward(x, params, reg_list, out_dims, C=C, H=H,
                                    mxu_dtype=jnp.float32, out_dtype=jnp.float32)
    jax.block_until_ready(shared)
    for reg in reg_list:
        jax.block_until_ready(outputs[reg])
    assert shared.shape == (B, H)
    assert jnp.allclose(shared, ref_shared, rtol=1e-2, atol=1e-2)
    for reg, d in zip(reg_list, out_dims):
        assert outputs[reg].shape == (B, d)
        assert jnp.allclose(outputs[reg], ref_outputs[reg], rtol=1e-2, atol=1e-2)

    # Default fast path: bf16 MXU operands/activations (f32 accumulation) and a
    # bf16 output slab (halved writeback).  Looser tolerance.
    outputs_bf, shared_bf = mtcnn_forward(x, params, reg_list, out_dims, C=C, H=H,
                                          out_dtype=jnp.bfloat16)
    jax.block_until_ready(shared_bf)
    assert shared_bf.shape == (B, H)
    assert jnp.allclose(shared_bf, ref_shared, rtol=6e-2, atol=6e-2)
    for reg, d in zip(reg_list, out_dims):
        assert outputs_bf[reg].shape == (B, d)
        assert jnp.allclose(outputs_bf[reg], ref_outputs[reg], rtol=6e-2, atol=6e-2)

    print("KERNEL_OK")
</pallas_src>

<mosaic_0001>
module attributes {stable_mosaic.version = 11 : i64} {
  func.func @_mtcnn_kernel(%arg0: i32, %arg1: memref<8x128xf32, #tpu.memory_space<vmem>>, %arg2: memref<128x2048xf32, #tpu.memory_space<vmem>>, %arg3: memref<1024x128xf32, #tpu.memory_space<vmem>>, %arg4: memref<128x128xf32, #tpu.memory_space<vmem>>, %arg5: memref<128x128xf32, #tpu.memory_space<vmem>>, %arg6: memref<8x128xf32, #tpu.memory_space<vmem>>, %arg7: memref<8x256xf32, #tpu.memory_space<vmem>>) attributes {dimension_semantics = [#tpu.dimension_semantics<parallel>], iteration_bounds = array<i64: 1>, scalar_prefetch = 0 : i64, scratch_operands = 0 : i64, tpu.core_type = #tpu.core_type<tc>, window_params = [{transform_indices = @transform_0, window_bounds = array<i64: 8, 128>}, {pipeline_mode = #tpu.pipeline_mode<synchronous>, transform_indices = @transform_1, window_bounds = array<i64: 128, 2048>}, {pipeline_mode = #tpu.pipeline_mode<synchronous>, transform_indices = @transform_2, window_bounds = array<i64: 1024, 128>}, {pipeline_mode = #tpu.pipeline_mode<synchronous>, transform_indices = @transform_3, window_bounds = array<i64: 128, 128>}, {pipeline_mode = #tpu.pipeline_mode<synchronous>, transform_indices = @transform_4, window_bounds = array<i64: 128, 128>}, {pipeline_mode = #tpu.pipeline_mode<synchronous>, transform_indices = @transform_5, window_bounds = array<i64: 8, 128>}, {transform_indices = @transform_6, window_bounds = array<i64: 8, 256>}]} {
    %c0 = arith.constant 0 : index
    %c0_0 = arith.constant 0 : index
    %0 = vector.load %arg1[%c0, %c0_0] : memref<8x128xf32, #tpu.memory_space<vmem>>, vector<8x128xf32>
    %c0_1 = arith.constant 0 : index
    %c0_2 = arith.constant 0 : index
    %1 = vector.load %arg2[%c0_1, %c0_2] : memref<128x2048xf32, #tpu.memory_space<vmem>>, vector<128x2048xf32>
    %cst = arith.constant dense<0.000000e+00> : vector<8x2048xf32>
    %2 = tpu.matmul %0, %1, %cst {dimension_numbers = #tpu.dot_dimension_numbers<[1], [0], [0], [1], [0, 0, 1, 1], [], []>} : vector<8x128xf32>, vector<128x2048xf32>, vector<8x2048xf32> -> vector<8x2048xf32>
    %3 = vector.extract_strided_slice %2 {offsets = [0, 0], sizes = [8, 1024], strides = [1, 1]} : vector<8x2048xf32> to vector<8x1024xf32>
    %4 = vector.extract_strided_slice %2 {offsets = [0, 1024], sizes = [8, 1024], strides = [1, 1]} : vector<8x2048xf32> to vector<8x1024xf32>
    %5 = arith.maximumf %3, %4 : vector<8x1024xf32>
    %cst_3 = arith.constant 0.000000e+00 : f32
    %6 = vector.broadcast %cst_3 : f32 to vector<8x1024xf32>
    %7 = arith.maximumf %5, %6 : vector<8x1024xf32>
    %c0_4 = arith.constant 0 : index
    %c0_5 = arith.constant 0 : index
    %8 = vector.load %arg6[%c0_4, %c0_5] : memref<8x128xf32, #tpu.memory_space<vmem>>, vector<1x128xf32>
    %c1 = arith.constant 1 : index
    %c0_6 = arith.constant 0 : index
    %9 = vector.load %arg6[%c1, %c0_6] : memref<8x128xf32, #tpu.memory_space<vmem>>, vector<1x128xf32>
    %c2 = arith.constant 2 : index
    %c0_7 = arith.constant 0 : index
    %10 = vector.load %arg6[%c2, %c0_7] : memref<8x128xf32, #tpu.memory_space<vmem>>, vector<1x128xf32>
    %c0_8 = arith.constant 0 : index
    %c0_9 = arith.constant 0 : index
    %11 = vector.load %arg3[%c0_8, %c0_9] : memref<1024x128xf32, #tpu.memory_space<vmem>>, vector<1024x128xf32>
    %cst_10 = arith.constant dense<0.000000e+00> : vector<8x128xf32>
    %12 = tpu.matmul %7, %11, %cst_10 {dimension_numbers = #tpu.dot_dimension_numbers<[1], [0], [0], [1], [0, 0, 1, 1], [], []>} : vector<8x1024xf32>, vector<1024x128xf32>, vector<8x128xf32> -> vector<8x128xf32>
    %13 = vector.broadcast %8 : vector<1x128xf32> to vector<8x128xf32>
    %14 = arith.addf %12, %13 : vector<8x128xf32>
    %cst_11 = arith.constant 0.000000e+00 : f32
    %15 = vector.broadcast %cst_11 : f32 to vector<8x128xf32>
    %16 = arith.maximumf %14, %15 : vector<8x128xf32>
    %c0_12 = arith.constant 0 : index
    %c0_13 = arith.constant 0 : index
    %17 = vector.load %arg4[%c0_12, %c0_13] : memref<128x128xf32, #tpu.memory_space<vmem>>, vector<128x128xf32>
    %cst_14 = arith.constant dense<0.000000e+00> : vector<8x128xf32>
    %18 = tpu.matmul %16, %17, %cst_14 {dimension_numbers = #tpu.dot_dimension_numbers<[1], [0], [0], [1], [0, 0, 1, 1], [], []>} : vector<8x128xf32>, vector<128x128xf32>, vector<8x128xf32> -> vector<8x128xf32>
    %19 = vector.broadcast %9 : vector<1x128xf32> to vector<8x128xf32>
    %20 = arith.addf %18, %19 : vector<8x128xf32>
    %cst_15 = arith.constant 0.000000e+00 : f32
    %21 = vector.broadcast %cst_15 : f32 to vector<8x128xf32>
    %22 = arith.maximumf %20, %21 : vector<8x128xf32>
    %c0_16 = arith.constant 0 : index
    %c0_17 = arith.constant 0 : index
    %23 = vector.load %arg5[%c0_16, %c0_17] : memref<128x128xf32, #tpu.memory_space<vmem>>, vector<128x128xf32>
    %cst_18 = arith.constant dense<0.000000e+00> : vector<8x128xf32>
    %24 = tpu.matmul %22, %23, %cst_18 {dimension_numbers = #tpu.dot_dimension_numbers<[1], [0], [0], [1], [0, 0, 1, 1], [], []>} : vector<8x128xf32>, vector<128x128xf32>, vector<8x128xf32> -> vector<8x128xf32>
    %25 = vector.broadcast %10 : vector<1x128xf32> to vector<8x128xf32>
    %26 = arith.addf %24, %25 : vector<8x128xf32>
    %c0_19 = arith.constant 0 : index
    %c0_20 = arith.constant 0 : index
    %27 = vector.load %arg7[%c0_19, %c0_20] : memref<8x256xf32, #tpu.memory_space<vmem>>, vector<8x128xf32>
    tpu.vector_store %arg7[%c0_19, %c0_20], %16 {strides = array<i32>} : memref<8x256xf32, #tpu.memory_space<vmem>>, vector<8x128xf32>,
    %c0_21 = arith.constant 0 : index
    %c128 = arith.constant 128 : index
    %28 = vector.load %arg7[%c0_21, %c128] : memref<8x256xf32, #tpu.memory_space<vmem>>, vector<8x128xf32>
    tpu.vector_store %arg7[%c0_21, %c128], %26 {strides = array<i32>} : memref<8x256xf32, #tpu.memory_space<vmem>>, vector<8x128xf32>,
    return
  }
  func.func @transform_0(%arg0: i32) -> (i32, i32) {
    %c0_i32 = arith.constant 0 : i32
    %c0_i32_0 = arith.constant 0 : i32
    return %arg0, %c0_i32 : i32, i32
  }
  func.func @transform_1(%arg0: i32) -> (i32, i32) {
    %c0_i32 = arith.constant 0 : i32
    %c0_i32_0 = arith.constant 0 : i32
    %c0_i32_1 = arith.constant 0 : i32
    return %c0_i32, %c0_i32_0 : i32, i32
  }
  func.func @transform_2(%arg0: i32) -> (i32, i32) {
    %c0_i32 = arith.constant 0 : i32
    %c0_i32_0 = arith.constant 0 : i32
    %c0_i32_1 = arith.constant 0 : i32
    return %c0_i32, %c0_i32_0 : i32, i32
  }
  func.func @transform_3(%arg0: i32) -> (i32, i32) {
    %c0_i32 = arith.constant 0 : i32
    %c0_i32_0 = arith.constant 0 : i32
    %c0_i32_1 = arith.constant 0 : i32
    return %c0_i32, %c0_i32_0 : i32, i32
  }
  func.func @transform_4(%arg0: i32) -> (i32, i32) {
    %c0_i32 = arith.constant 0 : i32
    %c0_i32_0 = arith.constant 0 : i32
    %c0_i32_1 = arith.constant 0 : i32
    return %c0_i32, %c0_i32_0 : i32, i32
  }
  func.func @transform_5(%arg0: i32) -> (i32, i32) {
    %c0_i32 = arith.constant 0 : i32
    %c0_i32_0 = arith.constant 0 : i32
    %c0_i32_1 = arith.constant 0 : i32
    return %c0_i32, %c0_i32_0 : i32, i32
  }
  func.func @transform_6(%arg0: i32) -> (i32, i32) {
    %c0_i32 = arith.constant 0 : i32
    %c0_i32_0 = arith.constant 0 : i32
    return %arg0, %c0_i32 : i32, i32
  }
}

</mosaic_0001>

<llo_original>
// kernel: tpu_custom_call.1
$region0: #{tpu_custom_call.1}
  #allocation0 [shape = 'u32[]', space=smem, size = 0x4, offset = 0x4, fixed_abs, tag = 'smem constant byte address 0x4 - core index']
  #allocation1 [shape = 'u32[72,128]{1,0:T(1,128)}', space=vmem, size = 0x9000, scoped, tag = 'internal scratch']
  %s0 = inlined_call_operand.hbm [shape: f32[8,128], index: 0, kind: input, shape index: {}]
  %s1 = inlined_call_operand.hbm [shape: f32[128,2048], index: 1, kind: input, shape index: {}]
  %s2 = inlined_call_operand.hbm [shape: f32[1024,128], index: 2, kind: input, shape index: {}]
  %s3 = inlined_call_operand.hbm [shape: f32[128,128], index: 3, kind: input, shape index: {}]
  %s4 = inlined_call_operand.hbm [shape: f32[128,128], index: 4, kind: input, shape index: {}]
  %s5 = inlined_call_operand.hbm [shape: f32[8,128], index: 5, kind: input, shape index: {}]
  %s6 = inlined_call_operand.hbm [shape: f32[8,256], index: 6, kind: output, shape index: {}]
  %s7 = sld [smem:[#allocation0]]
  $region58: #{tpu_custom_call.1} parent=0
    _
  %s9 = ssub.s32 1, %s7
  %s10 = scalar_select 0, %s9, %s7
  $region1: #{tpu_custom_call.1} parent=0
    #allocation2 [shape = 'u8[4096]{0}', space=vmem, size = 0x1000, scoped, tag = 'input window, operand 0, single buffered']
    #allocation3 [shape = 's32[1]{0}', space=sflag, size = 0x4, scoped, tag = 'scoped memory for tpu_custom_call.1']
    #allocation4 [shape = 's32[1]{0}', space=sflag, size = 0x4, scoped, tag = 'scoped memory for tpu_custom_call.1']
    #allocation5 [shape = 'u8[1048576]{0}', space=vmem, size = 0x100000, scoped, tag = 'input window, operand 1, single buffered']
    #allocation6 [shape = 's32[1]{0}', space=sflag, size = 0x4, scoped, tag = 'scoped memory for tpu_custom_call.1']
    #allocation7 [shape = 'u8[524288]{0}', space=vmem, size = 0x80000, scoped, tag = 'input window, operand 2, single buffered']
    #allocation8 [shape = 'u8[65536]{0}', space=vmem, size = 0x10000, scoped, tag = 'input window, operand 3, single buffered']
    #allocation9 [shape = 's32[1]{0}', space=sflag, size = 0x4, scoped, tag = 'scoped memory for tpu_custom_call.1']
    #allocation10 [shape = 'u8[65536]{0}', space=vmem, size = 0x10000, scoped, tag = 'input window, operand 4, single buffered']
    #allocation11 [shape = 'u8[4096]{0}', space=vmem, size = 0x1000, scoped, tag = 'input window, operand 5, single buffered']
    #allocation12 [shape = 's32[1]{0}', space=sflag, size = 0x4, scoped, tag = 'scoped memory for tpu_custom_call.1']
    #allocation13 [shape = 'u8[8192]{0}', space=vmem, size = 0x2000, scoped, tag = 'output window, operand 0, single buffered']
    %11 = vsyncpa [#allocation3], 0
    %12 = vsyncpa [#allocation6], 0
    %13 = vsyncpa [#allocation9], 0
    %14 = vsyncpa [#allocation12], 0
    %15 = vsyncpa [#allocation4], 0
    // Predicated region
    $region2: #{tpu_custom_call.1} parent=1 // pred_check
      _
    $region3: #{tpu_custom_call.1} parent=1 // pred_check_branch
      %17 = sbr.rel (0) target = $region5
    $region4: #{tpu_custom_call.1} parent=1 // pred_region
      %19 = vsyncadd [#allocation3], 0
      %s21 = sshll.u32 %s0, 4
      %s22 = int_to_ptr.hbm [resolvable:$true] %s21
      %s23 = sshll.u32 [#allocation2], 4
      %s24 = int_to_ptr.vmem [resolvable:$true] %s23
      %26 = dma.hbm_to_vmem [thread:$0]  %s22, 128, %s24, [#allocation3]
    $region5: #{tpu_custom_call.1} parent=1 // pred_fallthru
      _
    // Predicated region
    $region6: #{tpu_custom_call.1} parent=1 // pred_check
      _
    $region7: #{tpu_custom_call.1} parent=1 // pred_check_branch
      %28 = sbr.rel (0) target = $region9
    $region8: #{tpu_custom_call.1} parent=1 // pred_region
      %30 = vsyncadd [#allocation6], 0
      %s31 = sshll.u32 %s1, 4
      %s32 = int_to_ptr.hbm [resolvable:$true] %s31
      %s33 = sshll.u32 [#allocation5], 4
      %s34 = int_to_ptr.vmem [resolvable:$true] %s33
      %39 = dma.hbm_to_vmem [thread:$0]  %s32, 32768, %s34, [#allocation6], 2048, 2048, 128
    $region9: #{tpu_custom_call.1} parent=1 // pred_fallthru
      _
    // Predicated region
    $region10: #{tpu_custom_call.1} parent=1 // pred_check
      _
    $region11: #{tpu_custom_call.1} parent=1 // pred_check_branch
      %41 = sbr.rel (0) target = $region13
    $region12: #{tpu_custom_call.1} parent=1 // pred_region
      %43 = vsyncadd [#allocation6], 0
      %s44 = sshll.u32 %s2, 4
      %s45 = int_to_ptr.hbm [resolvable:$true] %s44
      %s46 = sshll.u32 [#allocation7], 4
      %s47 = int_to_ptr.vmem [resolvable:$true] %s46
      %52 = dma.hbm_to_vmem [thread:$0]  %s45, 16384, %s47, [#allocation6], 128, 128, 8
    $region13: #{tpu_custom_call.1} parent=1 // pred_fallthru
      _
    // Predicated region
    $region14: #{tpu_custom_call.1} parent=1 // pred_check
      _
    $region15: #{tpu_custom_call.1} parent=1 // pred_check_branch
      %54 = sbr.rel (0) target = $region17
    $region16: #{tpu_custom_call.1} parent=1 // pred_region
      %56 = vsyncadd [#allocation9], 0
      %s57 = sshll.u32 %s3, 4
      %s58 = int_to_ptr.hbm [resolvable:$true] %s57
      %s59 = sshll.u32 [#allocation8], 4
      %s60 = int_to_ptr.vmem [resolvable:$true] %s59
      %65 = dma.hbm_to_vmem [thread:$0]  %s58, 2048, %s60, [#allocation9], 128, 128, 8
    $region17: #{tpu_custom_call.1} parent=1 // pred_fallthru
      _
    // Predicated region
    $region18: #{tpu_custom_call.1} parent=1 // pred_check
      _
    $region19: #{tpu_custom_call.1} parent=1 // pred_check_branch
      %67 = sbr.rel (0) target = $region21
    $region20: #{tpu_custom_call.1} parent=1 // pred_region
      %69 = vsyncadd [#allocation9], 0
      %s70 = sshll.u32 %s4, 4
      %s71 = int_to_ptr.hbm [resolvable:$true] %s70
      %s72 = sshll.u32 [#allocation10], 4
      %s73 = int_to_ptr.vmem [resolvable:$true] %s72
      %78 = dma.hbm_to_vmem [thread:$0]  %s71, 2048, %s73, [#allocation9], 128, 128, 8
    $region21: #{tpu_custom_call.1} parent=1 // pred_fallthru
      _
    // Predicated region
    $region22: #{tpu_custom_call.1} parent=1 // pred_check
      _
    $region23: #{tpu_custom_call.1} parent=1 // pred_check_branch
      %80 = sbr.rel (0) target = $region25
    $region24: #{tpu_custom_call.1} parent=1 // pred_region
      %82 = vsyncadd [#allocation12], 0
      %s84 = sshll.u32 %s5, 4
      %s85 = int_to_ptr.hbm [resolvable:$true] %s84
      %s86 = sshll.u32 [#allocation11], 4
      %s87 = int_to_ptr.vmem [resolvable:$true] %s86
      %89 = dma.hbm_to_vmem [thread:$0]  %s85, 128, %s87, [#allocation12]
    $region25: #{tpu_custom_call.1} parent=1 // pred_fallthru
      _
    // Predicated region
    $region26: #{tpu_custom_call.1} parent=1 // pred_check
      _
    $region27: #{tpu_custom_call.1} parent=1 // pred_check_branch
      %91 = sbr.rel (0) target = $region29
    $region28: #{tpu_custom_call.1} parent=1 // pred_region
      %93 = dma.done [#allocation3], 128
    $region29: #{tpu_custom_call.1} parent=1 // pred_fallthru
      _
    // Predicated region
    $region30: #{tpu_custom_call.1} parent=1 // pred_check
      _
    $region31: #{tpu_custom_call.1} parent=1 // pred_check_branch
      %95 = sbr.rel (0) target = $region33
    $region32: #{tpu_custom_call.1} parent=1 // pred_region
      %97 = dma.done [#allocation6], 32768
    $region33: #{tpu_custom_call.1} parent=1 // pred_fallthru
      _
    // Predicated region
    $region34: #{tpu_custom_call.1} parent=1 // pred_check
      _
    $region35: #{tpu_custom_call.1} parent=1 // pred_check_branch
      %99 = sbr.rel (0) target = $region37
    $region36: #{tpu_custom_call.1} parent=1 // pred_region
      %101 = dma.done [#allocation6], 16384
    $region37: #{tpu_custom_call.1} parent=1 // pred_fallthru
      _
    // Predicated region
    $region38: #{tpu_custom_call.1} parent=1 // pred_check
      _
    $region39: #{tpu_custom_call.1} parent=1 // pred_check_branch
      %103 = sbr.rel (0) target = $region41
    $region40: #{tpu_custom_call.1} parent=1 // pred_region
      %105 = dma.done [#allocation9], 2048
    $region41: #{tpu_custom_call.1} parent=1 // pred_fallthru
      _
    // Predicated region
    $region42: #{tpu_custom_call.1} parent=1 // pred_check
      _
    $region43: #{tpu_custom_call.1} parent=1 // pred_check_branch
      %107 = sbr.rel (0) target = $region45
    $region44: #{tpu_custom_call.1} parent=1 // pred_region
      %109 = dma.done [#allocation9], 2048
    $region45: #{tpu_custom_call.1} parent=1 // pred_fallthru
      _
    // Predicated region
    $region46: #{tpu_custom_call.1} parent=1 // pred_check
      _
    $region47: #{tpu_custom_call.1} parent=1 // pred_check_branch
      %111 = sbr.rel (0) target = $region49
    $region48: #{tpu_custom_call.1} parent=1 // pred_region
      %113 = dma.done [#allocation12], 128
    $region49: #{tpu_custom_call.1} parent=1 // pred_fallthru
      _
    %v114 = vld [vmem:[#allocation2] sm:$0xff]
    %v115 = vld [vmem:[#allocation5] sm:$0xff]
    %v116 = vld [vmem:[#allocation5 + $0x8] sm:$0xff]
    %v117 = vld [vmem:[#allocation5 + $0x10] sm:$0xff]
    %v118 = vld [vmem:[#allocation5 + $0x18] sm:$0xff]
    %v119 = vld [vmem:[#allocation5 + $0x20] sm:$0xff]
    %v120 = vld [vmem:[#allocation5 + $0x28] sm:$0xff]
    %v121 = vld [vmem:[#allocation5 + $0x30] sm:$0xff]
    %v122 = vld [vmem:[#allocation5 + $0x38] sm:$0xff]
    %v123 = vld [vmem:[#allocation5 + $0x40] sm:$0xff]
    %v124 = vld [vmem:[#allocation5 + $0x48] sm:$0xff]
    %v125 = vld [vmem:[#allocation5 + $0x50] sm:$0xff]
    %v126 = vld [vmem:[#allocation5 + $0x58] sm:$0xff]
    %v127 = vld [vmem:[#allocation5 + $0x60] sm:$0xff]
    %v128 = vld [vmem:[#allocation5 + $0x68] sm:$0xff]
    %v129 = vld [vmem:[#allocation5 + $0x70] sm:$0xff]
    %v130 = vld [vmem:[#allocation5 + $0x78] sm:$0xff]
    %v131 = vld [vmem:[#allocation5 + $0x80] sm:$0xff]
    %v132 = vld [vmem:[#allocation5 + $0x88] sm:$0xff]
    %v133 = vld [vmem:[#allocation5 + $0x90] sm:$0xff]
    %v134 = vld [vmem:[#allocation5 + $0x98] sm:$0xff]
    %v135 = vld [vmem:[#allocation5 + $0xa0] sm:$0xff]
    %v136 = vld [vmem:[#allocation5 + $0xa8] sm:$0xff]
    %v137 = vld [vmem:[#allocation5 + $0xb0] sm:$0xff]
    %v138 = vld [vmem:[#allocation5 + $0xb8] sm:$0xff]
    %v139 = vld [vmem:[#allocation5 + $0xc0] sm:$0xff]
    %v140 = vld [vmem:[#allocation5 + $0xc8] sm:$0xff]
    %v141 = vld [vmem:[#allocation5 + $0xd0] sm:$0xff]
    %v142 = vld [vmem:[#allocation5 + $0xd8] sm:$0xff]
    %v143 = vld [vmem:[#allocation5 + $0xe0] sm:$0xff]
    %v144 = vld [vmem:[#allocation5 + $0xe8] sm:$0xff]
    %v145 = vld [vmem:[#allocation5 + $0xf0] sm:$0xff]
    %v146 = vld [vmem:[#allocation5 + $0xf8] sm:$0xff]
    %v147 = vld [vmem:[#allocation5 + $0x100] sm:$0xff]
    %v148 = vld [vmem:[#allocation5 + $0x108] sm:$0xff]
    %v149 = vld [vmem:[#allocation5 + $0x110] sm:$0xff]
    %v150 = vld [vmem:[#allocation5 + $0x118] sm:$0xff]
    %v151 = vld [vmem:[#allocation5 + $0x120] sm:$0xff]
    %v152 = vld [vmem:[#allocation5 + $0x128] sm:$0xff]
    %v153 = vld [vmem:[#allocation5 + $0x130] sm:$0xff]
    %v154 = vld [vmem:[#allocation5 + $0x138] sm:$0xff]
    %v155 = vld [vmem:[#allocation5 + $0x140] sm:$0xff]
    %v156 = vld [vmem:[#allocation5 + $0x148] sm:$0xff]
    %v157 = vld [vmem:[#allocation5 + $0x150] sm:$0xff]
    %v158 = vld [vmem:[#allocation5 + $0x158] sm:$0xff]
    %v159 = vld [vmem:[#allocation5 + $0x160] sm:$0xff]
    %v160 = vld [vmem:[#allocation5 + $0x168] sm:$0xff]
    %v161 = vld [vmem:[#allocation5 + $0x170] sm:$0xff]
    %v162 = vld [vmem:[#allocation5 + $0x178] sm:$0xff]
    %v163 = vld [vmem:[#allocation5 + $0x180] sm:$0xff]
    %v164 = vld [vmem:[#allocation5 + $0x188] sm:$0xff]
    %v165 = vld [vmem:[#allocation5 + $0x190] sm:$0xff]
    %v166 = vld [vmem:[#allocation5 + $0x198] sm:$0xff]
    %v167 = vld [vmem:[#allocation5 + $0x1a0] sm:$0xff]
    %v168 = vld [vmem:[#allocation5 + $0x1a8] sm:$0xff]
    %v169 = vld [vmem:[#allocation5 + $0x1b0] sm:$0xff]
    %v170 = vld [vmem:[#allocation5 + $0x1b8] sm:$0xff]
    %v171 = vld [vmem:[#allocation5 + $0x1c0] sm:$0xff]
    %v172 = vld [vmem:[#allocation5 + $0x1c8] sm:$0xff]
    %v173 = vld [vmem:[#allocation5 + $0x1d0] sm:$0xff]
    %v174 = vld [vmem:[#allocation5 + $0x1d8] sm:$0xff]
    %v175 = vld [vmem:[#allocation5 + $0x1e0] sm:$0xff]
    %v176 = vld [vmem:[#allocation5 + $0x1e8] sm:$0xff]
    %v177 = vld [vmem:[#allocation5 + $0x1f0] sm:$0xff]
    %v178 = vld [vmem:[#allocation5 + $0x1f8] sm:$0xff]
    %v179 = vld [vmem:[#allocation5 + $0x200] sm:$0xff]
    %v180 = vld [vmem:[#allocation5 + $0x208] sm:$0xff]
    %v181 = vld [vmem:[#allocation5 + $0x210] sm:$0xff]
    %v182 = vld [vmem:[#allocation5 + $0x218] sm:$0xff]
    %v183 = vld [vmem:[#allocation5 + $0x220] sm:$0xff]
    %v184 = vld [vmem:[#allocation5 + $0x228] sm:$0xff]
    %v185 = vld [vmem:[#allocation5 + $0x230] sm:$0xff]
    %v186 = vld [vmem:[#allocation5 + $0x238] sm:$0xff]
    %v187 = vld [vmem:[#allocation5 + $0x240] sm:$0xff]
    %v188 = vld [vmem:[#allocation5 + $0x248] sm:$0xff]
    %v189 = vld [vmem:[#allocation5 + $0x250] sm:$0xff]
    %v190 = vld [vmem:[#allocation5 + $0x258] sm:$0xff]
    %v191 = vld [vmem:[#allocation5 + $0x260] sm:$0xff]
    %v192 = vld [vmem:[#allocation5 + $0x268] sm:$0xff]
    %v193 = vld [vmem:[#allocation5 + $0x270] sm:$0xff]
    %v194 = vld [vmem:[#allocation5 + $0x278] sm:$0xff]
    %v195 = vld [vmem:[#allocation5 + $0x280] sm:$0xff]
    %v196 = vld [vmem:[#allocation5 + $0x288] sm:$0xff]
    %v197 = vld [vmem:[#allocation5 + $0x290] sm:$0xff]
    %v198 = vld [vmem:[#allocation5 + $0x298] sm:$0xff]
    %v199 = vld [vmem:[#allocation5 + $0x2a0] sm:$0xff]
    %v200 = vld [vmem:[#allocation5 + $0x2a8] sm:$0xff]
    %v201 = vld [vmem:[#allocation5 + $0x2b0] sm:$0xff]
    %v202 = vld [vmem:[#allocation5 + $0x2b8] sm:$0xff]
    %v203 = vld [vmem:[#allocation5 + $0x2c0] sm:$0xff]
    %v204 = vld [vmem:[#allocation5 + $0x2c8] sm:$0xff]
    %v205 = vld [vmem:[#allocation5 + $0x2d0] sm:$0xff]
    %v206 = vld [vmem:[#allocation5 + $0x2d8] sm:$0xff]
    %v207 = vld [vmem:[#allocation5 + $0x2e0] sm:$0xff]
    %v208 = vld [vmem:[#allocation5 + $0x2e8] sm:$0xff]
    %v209 = vld [vmem:[#allocation5 + $0x2f0] sm:$0xff]
    %v210 = vld [vmem:[#allocation5 + $0x2f8] sm:$0xff]
    %v211 = vld [vmem:[#allocation5 + $0x300] sm:$0xff]
    %v212 = vld [vmem:[#allocation5 + $0x308] sm:$0xff]
    %v213 = vld [vmem:[#allocation5 + $0x310] sm:$0xff]
    %v214 = vld [vmem:[#allocation5 + $0x318] sm:$0xff]
    %v215 = vld [vmem:[#allocation5 + $0x320] sm:$0xff]
    %v216 = vld [vmem:[#allocation5 + $0x328] sm:$0xff]
    %v217 = vld [vmem:[#allocation5 + $0x330] sm:$0xff]
    %v218 = vld [vmem:[#allocation5 + $0x338] sm:$0xff]
    %v219 = vld [vmem:[#allocation5 + $0x340] sm:$0xff]
    %v220 = vld [vmem:[#allocation5 + $0x348] sm:$0xff]
    %v221 = vld [vmem:[#allocation5 + $0x350] sm:$0xff]
    %v222 = vld [vmem:[#allocation5 + $0x358] sm:$0xff]
    %v223 = vld [vmem:[#allocation5 + $0x360] sm:$0xff]
    %v224 = vld [vmem:[#allocation5 + $0x368] sm:$0xff]
    %v225 = vld [vmem:[#allocation5 + $0x370] sm:$0xff]
    %v226 = vld [vmem:[#allocation5 + $0x378] sm:$0xff]
    %v227 = vld [vmem:[#allocation5 + $0x380] sm:$0xff]
    %v228 = vld [vmem:[#allocation5 + $0x388] sm:$0xff]
    %v229 = vld [vmem:[#allocation5 + $0x390] sm:$0xff]
    %v230 = vld [vmem:[#allocation5 + $0x398] sm:$0xff]
    %v231 = vld [vmem:[#allocation5 + $0x3a0] sm:$0xff]
    %v232 = vld [vmem:[#allocation5 + $0x3a8] sm:$0xff]
    %v233 = vld [vmem:[#allocation5 + $0x3b0] sm:$0xff]
    %v234 = vld [vmem:[#allocation5 + $0x3b8] sm:$0xff]
    %v235 = vld [vmem:[#allocation5 + $0x3c0] sm:$0xff]
    %v236 = vld [vmem:[#allocation5 + $0x3c8] sm:$0xff]
    %v237 = vld [vmem:[#allocation5 + $0x3d0] sm:$0xff]
    %v238 = vld [vmem:[#allocation5 + $0x3d8] sm:$0xff]
    %v239 = vld [vmem:[#allocation5 + $0x3e0] sm:$0xff]
    %v240 = vld [vmem:[#allocation5 + $0x3e8] sm:$0xff]
    %v241 = vld [vmem:[#allocation5 + $0x3f0] sm:$0xff]
    %v242 = vld [vmem:[#allocation5 + $0x3f8] sm:$0xff]
    %v243 = vld [vmem:[#allocation5 + $0x400] sm:$0xff]
    %v244 = vld [vmem:[#allocation5 + $0x408] sm:$0xff]
    %v245 = vld [vmem:[#allocation5 + $0x410] sm:$0xff]
    %v246 = vld [vmem:[#allocation5 + $0x418] sm:$0xff]
    %v247 = vld [vmem:[#allocation5 + $0x420] sm:$0xff]
    %v248 = vld [vmem:[#allocation5 + $0x428] sm:$0xff]
    %v249 = vld [vmem:[#allocation5 + $0x430] sm:$0xff]
    %v250 = vld [vmem:[#allocation5 + $0x438] sm:$0xff]
    %v251 = vld [vmem:[#allocation5 + $0x440] sm:$0xff]
    %v252 = vld [vmem:[#allocation5 + $0x448] sm:$0xff]
    %v253 = vld [vmem:[#allocation5 + $0x450] sm:$0xff]
    %v254 = vld [vmem:[#allocation5 + $0x458] sm:$0xff]
    %v255 = vld [vmem:[#allocation5 + $0x460] sm:$0xff]
    %v256 = vld [vmem:[#allocation5 + $0x468] sm:$0xff]
    %v257 = vld [vmem:[#allocation5 + $0x470] sm:$0xff]
    %v258 = vld [vmem:[#allocation5 + $0x478] sm:$0xff]
    %v259 = vld [vmem:[#allocation5 + $0x480] sm:$0xff]
    %v260 = vld [vmem:[#allocation5 + $0x488] sm:$0xff]
    %v261 = vld [vmem:[#allocation5 + $0x490] sm:$0xff]
    %v262 = vld [vmem:[#allocation5 + $0x498] sm:$0xff]
    %v263 = vld [vmem:[#allocation5 + $0x4a0] sm:$0xff]
    %v264 = vld [vmem:[#allocation5 + $0x4a8] sm:$0xff]
    %v265 = vld [vmem:[#allocation5 + $0x4b0] sm:$0xff]
    %v266 = vld [vmem:[#allocation5 + $0x4b8] sm:$0xff]
    %v267 = vld [vmem:[#allocation5 + $0x4c0] sm:$0xff]
    %v268 = vld [vmem:[#allocation5 + $0x4c8] sm:$0xff]
    %v269 = vld [vmem:[#allocation5 + $0x4d0] sm:$0xff]
    %v270 = vld [vmem:[#allocation5 + $0x4d8] sm:$0xff]
    %v271 = vld [vmem:[#allocation5 + $0x4e0] sm:$0xff]
    %v272 = vld [vmem:[#allocation5 + $0x4e8] sm:$0xff]
    %v273 = vld [vmem:[#allocation5 + $0x4f0] sm:$0xff]
    %v274 = vld [vmem:[#allocation5 + $0x4f8] sm:$0xff]
    %v275 = vld [vmem:[#allocation5 + $0x500] sm:$0xff]
    %v276 = vld [vmem:[#allocation5 + $0x508] sm:$0xff]
    %v277 = vld [vmem:[#allocation5 + $0x510] sm:$0xff]
    %v278 = vld [vmem:[#allocation5 + $0x518] sm:$0xff]
    %v279 = vld [vmem:[#allocation5 + $0x520] sm:$0xff]
    %v280 = vld [vmem:[#allocation5 + $0x528] sm:$0xff]
    %v281 = vld [vmem:[#allocation5 + $0x530] sm:$0xff]
    %v282 = vld [vmem:[#allocation5 + $0x538] sm:$0xff]
    %v283 = vld [vmem:[#allocation5 + $0x540] sm:$0xff]
    %v284 = vld [vmem:[#allocation5 + $0x548] sm:$0xff]
    %v285 = vld [vmem:[#allocation5 + $0x550] sm:$0xff]
    %v286 = vld [vmem:[#allocation5 + $0x558] sm:$0xff]
    %v287 = vld [vmem:[#allocation5 + $0x560] sm:$0xff]
    %v288 = vld [vmem:[#allocation5 + $0x568] sm:$0xff]
    %v289 = vld [vmem:[#allocation5 + $0x570] sm:$0xff]
    %v290 = vld [vmem:[#allocation5 + $0x578] sm:$0xff]
    %v291 = vld [vmem:[#allocation5 + $0x580] sm:$0xff]
    %v292 = vld [vmem:[#allocation5 + $0x588] sm:$0xff]
    %v293 = vld [vmem:[#allocation5 + $0x590] sm:$0xff]
    %v294 = vld [vmem:[#allocation5 + $0x598] sm:$0xff]
    %v295 = vld [vmem:[#allocation5 + $0x5a0] sm:$0xff]
    %v296 = vld [vmem:[#allocation5 + $0x5a8] sm:$0xff]
    %v297 = vld [vmem:[#allocation5 + $0x5b0] sm:$0xff]
    %v298 = vld [vmem:[#allocation5 + $0x5b8] sm:$0xff]
    %v299 = vld [vmem:[#allocation5 + $0x5c0] sm:$0xff]
    %v300 = vld [vmem:[#allocation5 + $0x5c8] sm:$0xff]
    %v301 = vld [vmem:[#allocation5 + $0x5d0] sm:$0xff]
    %v302 = vld [vmem:[#allocation5 + $0x5d8] sm:$0xff]
    %v303 = vld [vmem:[#allocation5 + $0x5e0] sm:$0xff]
    %v304 = vld [vmem:[#allocation5 + $0x5e8] sm:$0xff]
    %v305 = vld [vmem:[#allocation5 + $0x5f0] sm:$0xff]
    %v306 = vld [vmem:[#allocation5 + $0x5f8] sm:$0xff]
    %v307 = vld [vmem:[#allocation5 + $0x600] sm:$0xff]
    %v308 = vld [vmem:[#allocation5 + $0x608] sm:$0xff]
    %v309 = vld [vmem:[#allocation5 + $0x610] sm:$0xff]
    %v310 = vld [vmem:[#allocation5 + $0x618] sm:$0xff]
    %v311 = vld [vmem:[#allocation5 + $0x620] sm:$0xff]
    %v312 = vld [vmem:[#allocation5 + $0x628] sm:$0xff]
    %v313 = vld [vmem:[#allocation5 + $0x630] sm:$0xff]
    %v314 = vld [vmem:[#allocation5 + $0x638] sm:$0xff]
    %v315 = vld [vmem:[#allocation5 + $0x640] sm:$0xff]
    %v316 = vld [vmem:[#allocation5 + $0x648] sm:$0xff]
    %v317 = vld [vmem:[#allocation5 + $0x650] sm:$0xff]
    %v318 = vld [vmem:[#allocation5 + $0x658] sm:$0xff]
    %v319 = vld [vmem:[#allocation5 + $0x660] sm:$0xff]
    %v320 = vld [vmem:[#allocation5 + $0x668] sm:$0xff]
    %v321 = vld [vmem:[#allocation5 + $0x670] sm:$0xff]
    %v322 = vld [vmem:[#allocation5 + $0x678] sm:$0xff]
    %v323 = vld [vmem:[#allocation5 + $0x680] sm:$0xff]
    %v324 = vld [vmem:[#allocation5 + $0x688] sm:$0xff]
    %v325 = vld [vmem:[#allocation5 + $0x690] sm:$0xff]
    %v326 = vld [vmem:[#allocation5 + $0x698] sm:$0xff]
    %v327 = vld [vmem:[#allocation5 + $0x6a0] sm:$0xff]
    %v328 = vld [vmem:[#allocation5 + $0x6a8] sm:$0xff]
    %v329 = vld [vmem:[#allocation5 + $0x6b0] sm:$0xff]
    %v330 = vld [vmem:[#allocation5 + $0x6b8] sm:$0xff]
    %v331 = vld [vmem:[#allocation5 + $0x6c0] sm:$0xff]
    %v332 = vld [vmem:[#allocation5 + $0x6c8] sm:$0xff]
    %v333 = vld [vmem:[#allocation5 + $0x6d0] sm:$0xff]
    %v334 = vld [vmem:[#allocation5 + $0x6d8] sm:$0xff]
    %v335 = vld [vmem:[#allocation5 + $0x6e0] sm:$0xff]
    %v336 = vld [vmem:[#allocation5 + $0x6e8] sm:$0xff]
    %v337 = vld [vmem:[#allocation5 + $0x6f0] sm:$0xff]
    %v338 = vld [vmem:[#allocation5 + $0x6f8] sm:$0xff]
    %v339 = vld [vmem:[#allocation5 + $0x700] sm:$0xff]
    %v340 = vld [vmem:[#allocation5 + $0x708] sm:$0xff]
    %v341 = vld [vmem:[#allocation5 + $0x710] sm:$0xff]
    %v342 = vld [vmem:[#allocation5 + $0x718] sm:$0xff]
    %v343 = vld [vmem:[#allocation5 + $0x720] sm:$0xff]
    %v344 = vld [vmem:[#allocation5 + $0x728] sm:$0xff]
    %v345 = vld [vmem:[#allocation5 + $0x730] sm:$0xff]
    %v346 = vld [vmem:[#allocation5 + $0x738] sm:$0xff]
    %v347 = vld [vmem:[#allocation5 + $0x740] sm:$0xff]
    %v348 = vld [vmem:[#allocation5 + $0x748] sm:$0xff]
    %v349 = vld [vmem:[#allocation5 + $0x750] sm:$0xff]
    %v350 = vld [vmem:[#allocation5 + $0x758] sm:$0xff]
    %v351 = vld [vmem:[#allocation5 + $0x760] sm:$0xff]
    %v352 = vld [vmem:[#allocation5 + $0x768] sm:$0xff]
    %v353 = vld [vmem:[#allocation5 + $0x770] sm:$0xff]
    %v354 = vld [vmem:[#allocation5 + $0x778] sm:$0xff]
    %v355 = vld [vmem:[#allocation5 + $0x780] sm:$0xff]
    %v356 = vld [vmem:[#allocation5 + $0x788] sm:$0xff]
    %v357 = vld [vmem:[#allocation5 + $0x790] sm:$0xff]
    %v358 = vld [vmem:[#allocation5 + $0x798] sm:$0xff]
    %v359 = vld [vmem:[#allocation5 + $0x7a0] sm:$0xff]
    %v360 = vld [vmem:[#allocation5 + $0x7a8] sm:$0xff]
    %v361 = vld [vmem:[#allocation5 + $0x7b0] sm:$0xff]
    %v362 = vld [vmem:[#allocation5 + $0x7b8] sm:$0xff]
    %v363 = vld [vmem:[#allocation5 + $0x7c0] sm:$0xff]
    %v364 = vld [vmem:[#allocation5 + $0x7c8] sm:$0xff]
    %v365 = vld [vmem:[#allocation5 + $0x7d0] sm:$0xff]
    %v366 = vld [vmem:[#allocation5 + $0x7d8] sm:$0xff]
    %v367 = vld [vmem:[#allocation5 + $0x7e0] sm:$0xff]
    %v368 = vld [vmem:[#allocation5 + $0x7e8] sm:$0xff]
    %v369 = vld [vmem:[#allocation5 + $0x7f0] sm:$0xff]
    %v370 = vld [vmem:[#allocation5 + $0x7f8] sm:$0xff]
    %371 = vmatpush.msra.mxu0 %v355
    %372 = vmatpush.msra.mxu0 %v339
    %373 = vmatpush.msra.mxu0 %v323
    %374 = vmatpush.msra.mxu0 %v307
    %375 = vmatpush.msra.mxu0 %v291
    %376 = vmatpush.msra.mxu0 %v275
    %377 = vmatpush.msra.mxu0 %v259
    %378 = vmatpush.msra.mxu0 %v243
    %379 = vmatpush.msra.mxu0 %v227
    %380 = vmatpush.msra.mxu0 %v211
    %381 = vmatpush.msra.mxu0 %v195
    %382 = vmatpush.msra.mxu0 %v179
    %383 = vmatpush.msra.mxu0 %v163
    %384 = vmatpush.msra.mxu0 %v147
    %385 = vmatpush.msra.mxu0 %v131
    %386 = vmatpush.msra.mxu0 %v115
    %387 = vmatmul.f32.gmra.mxu0 %v114
    %v388 = vpop.f32.mrf.mxu0
    %v389 = vadd.f32 0.0, %v388
    %390 = vdwg.mxu0
    %391 = vmatpush.msra.mxu0 %v356
    %392 = vmatpush.msra.mxu0 %v340
    %393 = vmatpush.msra.mxu0 %v324
    %394 = vmatpush.msra.mxu0 %v308
    %395 = vmatpush.msra.mxu0 %v292
    %396 = vmatpush.msra.mxu0 %v276
    %397 = vmatpush.msra.mxu0 %v260
    %398 = vmatpush.msra.mxu0 %v244
    %399 = vmatpush.msra.mxu0 %v228
    %400 = vmatpush.msra.mxu0 %v212
    %401 = vmatpush.msra.mxu0 %v196
    %402 = vmatpush.msra.mxu0 %v180
    %403 = vmatpush.msra.mxu0 %v164
    %404 = vmatpush.msra.mxu0 %v148
    %405 = vmatpush.msra.mxu0 %v132
    %406 = vmatpush.msra.mxu0 %v116
    %407 = vmatmul.f32.gmra.mxu0 %v114
    %v408 = vpop.f32.mrf.mxu0
    %v409 = vadd.f32 0.0, %v408
    %410 = vdwg.mxu0
    %411 = vmatpush.msra.mxu0 %v357
    %412 = vmatpush.msra.mxu0 %v341
    %413 = vmatpush.msra.mxu0 %v325
    %414 = vmatpush.msra.mxu0 %v309
    %415 = vmatpush.msra.mxu0 %v293
    %416 = vmatpush.msra.mxu0 %v277
    %417 = vmatpush.msra.mxu0 %v261
    %418 = vmatpush.msra.mxu0 %v245
    %419 = vmatpush.msra.mxu0 %v229
    %420 = vmatpush.msra.mxu0 %v213
    %421 = vmatpush.msra.mxu0 %v197
    %422 = vmatpush.msra.mxu0 %v181
    %423 = vmatpush.msra.mxu0 %v165
    %424 = vmatpush.msra.mxu0 %v149
    %425 = vmatpush.msra.mxu0 %v133
    %426 = vmatpush.msra.mxu0 %v117
    %427 = vmatmul.f32.gmra.mxu0 %v114
    %v428 = vpop.f32.mrf.mxu0
    %v429 = vadd.f32 0.0, %v428
    %430 = vdwg.mxu0
    %431 = vmatpush.msra.mxu0 %v358
    %432 = vmatpush.msra.mxu0 %v342
    %433 = vmatpush.msra.mxu0 %v326
    %434 = vmatpush.msra.mxu0 %v310
    %435 = vmatpush.msra.mxu0 %v294
    %436 = vmatpush.msra.mxu0 %v278
    %437 = vmatpush.msra.mxu0 %v262
    %438 = vmatpush.msra.mxu0 %v246
    %439 = vmatpush.msra.mxu0 %v230
    %440 = vmatpush.msra.mxu0 %v214
    %441 = vmatpush.msra.mxu0 %v198
    %442 = vmatpush.msra.mxu0 %v182
    %443 = vmatpush.msra.mxu0 %v166
    %444 = vmatpush.msra.mxu0 %v150
    %445 = vmatpush.msra.mxu0 %v134
    %446 = vmatpush.msra.mxu0 %v118
    %447 = vmatmul.f32.gmra.mxu0 %v114
    %v448 = vpop.f32.mrf.mxu0
    %v449 = vadd.f32 0.0, %v448
    %450 = vdwg.mxu0
    %451 = vmatpush.msra.mxu0 %v359
    %452 = vmatpush.msra.mxu0 %v343
    %453 = vmatpush.msra.mxu0 %v327
    %454 = vmatpush.msra.mxu0 %v311
    %455 = vmatpush.msra.mxu0 %v295
    %456 = vmatpush.msra.mxu0 %v279
    %457 = vmatpush.msra.mxu0 %v263
    %458 = vmatpush.msra.mxu0 %v247
    %459 = vmatpush.msra.mxu0 %v231
    %460 = vmatpush.msra.mxu0 %v215
    %461 = vmatpush.msra.mxu0 %v199
    %462 = vmatpush.msra.mxu0 %v183
    %463 = vmatpush.msra.mxu0 %v167
    %464 = vmatpush.msra.mxu0 %v151
    %465 = vmatpush.msra.mxu0 %v135
    %466 = vmatpush.msra.mxu0 %v119
    %467 = vmatmul.f32.gmra.mxu0 %v114
    %v468 = vpop.f32.mrf.mxu0
    %v469 = vadd.f32 0.0, %v468
    %470 = vdwg.mxu0
    %471 = vmatpush.msra.mxu0 %v360
    %472 = vmatpush.msra.mxu0 %v344
    %473 = vmatpush.msra.mxu0 %v328
    %474 = vmatpush.msra.mxu0 %v312
    %475 = vmatpush.msra.mxu0 %v296
    %476 = vmatpush.msra.mxu0 %v280
    %477 = vmatpush.msra.mxu0 %v264
    %478 = vmatpush.msra.mxu0 %v248
    %479 = vmatpush.msra.mxu0 %v232
    %480 = vmatpush.msra.mxu0 %v216
    %481 = vmatpush.msra.mxu0 %v200
    %482 = vmatpush.msra.mxu0 %v184
    %483 = vmatpush.msra.mxu0 %v168
    %484 = vmatpush.msra.mxu0 %v152
    %485 = vmatpush.msra.mxu0 %v136
    %486 = vmatpush.msra.mxu0 %v120
    %487 = vmatmul.f32.gmra.mxu0 %v114
    %v488 = vpop.f32.mrf.mxu0
    %v489 = vadd.f32 0.0, %v488
    %490 = vdwg.mxu0
    %491 = vmatpush.msra.mxu0 %v361
    %492 = vmatpush.msra.mxu0 %v345
    %493 = vmatpush.msra.mxu0 %v329
    %494 = vmatpush.msra.mxu0 %v313
    %495 = vmatpush.msra.mxu0 %v297
    %496 = vmatpush.msra.mxu0 %v281
    %497 = vmatpush.msra.mxu0 %v265
    %498 = vmatpush.msra.mxu0 %v249
    %499 = vmatpush.msra.mxu0 %v233
    %500 = vmatpush.msra.mxu0 %v217
    %501 = vmatpush.msra.mxu0 %v201
    %502 = vmatpush.msra.mxu0 %v185
    %503 = vmatpush.msra.mxu0 %v169
    %504 = vmatpush.msra.mxu0 %v153
    %505 = vmatpush.msra.mxu0 %v137
    %506 = vmatpush.msra.mxu0 %v121
    %507 = vmatmul.f32.gmra.mxu0 %v114
    %v508 = vpop.f32.mrf.mxu0
    %v509 = vadd.f32 0.0, %v508
    %510 = vdwg.mxu0
    %511 = vmatpush.msra.mxu0 %v362
    %512 = vmatpush.msra.mxu0 %v346
    %513 = vmatpush.msra.mxu0 %v330
    %514 = vmatpush.msra.mxu0 %v314
    %515 = vmatpush.msra.mxu0 %v298
    %516 = vmatpush.msra.mxu0 %v282
    %517 = vmatpush.msra.mxu0 %v266
    %518 = vmatpush.msra.mxu0 %v250
    %519 = vmatpush.msra.mxu0 %v234
    %520 = vmatpush.msra.mxu0 %v218
    %521 = vmatpush.msra.mxu0 %v202
    %522 = vmatpush.msra.mxu0 %v186
    %523 = vmatpush.msra.mxu0 %v170
    %524 = vmatpush.msra.mxu0 %v154
    %525 = vmatpush.msra.mxu0 %v138
    %526 = vmatpush.msra.mxu0 %v122
    %527 = vmatmul.f32.gmra.mxu0 %v114
    %v528 = vpop.f32.mrf.mxu0
    %v529 = vadd.f32 0.0, %v528
    %530 = vdwg.mxu0
    %531 = vmatpush.msra.mxu0 %v363
    %532 = vmatpush.msra.mxu0 %v347
    %533 = vmatpush.msra.mxu0 %v331
    %534 = vmatpush.msra.mxu0 %v315
    %535 = vmatpush.msra.mxu0 %v299
    %536 = vmatpush.msra.mxu0 %v283
    %537 = vmatpush.msra.mxu0 %v267
    %538 = vmatpush.msra.mxu0 %v251
    %539 = vmatpush.msra.mxu0 %v235
    %540 = vmatpush.msra.mxu0 %v219
    %541 = vmatpush.msra.mxu0 %v203
    %542 = vmatpush.msra.mxu0 %v187
    %543 = vmatpush.msra.mxu0 %v171
    %544 = vmatpush.msra.mxu0 %v155
    %545 = vmatpush.msra.mxu0 %v139
    %546 = vmatpush.msra.mxu0 %v123
    %547 = vmatmul.f32.gmra.mxu0 %v114
    %v548 = vpop.f32.mrf.mxu0
    %v549 = vadd.f32 0.0, %v548
    %550 = vdwg.mxu0
    %551 = vmatpush.msra.mxu0 %v364
    %552 = vmatpush.msra.mxu0 %v348
    %553 = vmatpush.msra.mxu0 %v332
    %554 = vmatpush.msra.mxu0 %v316
    %555 = vmatpush.msra.mxu0 %v300
    %556 = vmatpush.msra.mxu0 %v284
    %557 = vmatpush.msra.mxu0 %v268
    %558 = vmatpush.msra.mxu0 %v252
    %559 = vmatpush.msra.mxu0 %v236
    %560 = vmatpush.msra.mxu0 %v220
    %561 = vmatpush.msra.mxu0 %v204
    %562 = vmatpush.msra.mxu0 %v188
    %563 = vmatpush.msra.mxu0 %v172
    %564 = vmatpush.msra.mxu0 %v156
    %565 = vmatpush.msra.mxu0 %v140
    %566 = vmatpush.msra.mxu0 %v124
    %567 = vmatmul.f32.gmra.mxu0 %v114
    %v568 = vpop.f32.mrf.mxu0
    %v569 = vadd.f32 0.0, %v568
    %570 = vdwg.mxu0
    %571 = vmatpush.msra.mxu0 %v365
    %572 = vmatpush.msra.mxu0 %v349
    %573 = vmatpush.msra.mxu0 %v333
    %574 = vmatpush.msra.mxu0 %v317
    %575 = vmatpush.msra.mxu0 %v301
    %576 = vmatpush.msra.mxu0 %v285
    %577 = vmatpush.msra.mxu0 %v269
    %578 = vmatpush.msra.mxu0 %v253
    %579 = vmatpush.msra.mxu0 %v237
    %580 = vmatpush.msra.mxu0 %v221
    %581 = vmatpush.msra.mxu0 %v205
    %582 = vmatpush.msra.mxu0 %v189
    %583 = vmatpush.msra.mxu0 %v173
    %584 = vmatpush.msra.mxu0 %v157
    %585 = vmatpush.msra.mxu0 %v141
    %586 = vmatpush.msra.mxu0 %v125
    %587 = vmatmul.f32.gmra.mxu0 %v114
    %v588 = vpop.f32.mrf.mxu0
    %v589 = vadd.f32 0.0, %v588
    %590 = vdwg.mxu0
    %591 = vmatpush.msra.mxu0 %v366
    %592 = vmatpush.msra.mxu0 %v350
    %593 = vmatpush.msra.mxu0 %v334
    %594 = vmatpush.msra.mxu0 %v318
    %595 = vmatpush.msra.mxu0 %v302
    %596 = vmatpush.msra.mxu0 %v286
    %597 = vmatpush.msra.mxu0 %v270
    %598 = vmatpush.msra.mxu0 %v254
    %599 = vmatpush.msra.mxu0 %v238
    %600 = vmatpush.msra.mxu0 %v222
    %601 = vmatpush.msra.mxu0 %v206
    %602 = vmatpush.msra.mxu0 %v190
    %603 = vmatpush.msra.mxu0 %v174
    %604 = vmatpush.msra.mxu0 %v158
    %605 = vmatpush.msra.mxu0 %v142
    %606 = vmatpush.msra.mxu0 %v126
    %607 = vmatmul.f32.gmra.mxu0 %v114
    %v608 = vpop.f32.mrf.mxu0
    %v609 = vadd.f32 0.0, %v608
    %610 = vdwg.mxu0
    %611 = vmatpush.msra.mxu0 %v367
    %612 = vmatpush.msra.mxu0 %v351
    %613 = vmatpush.msra.mxu0 %v335
    %614 = vmatpush.msra.mxu0 %v319
    %615 = vmatpush.msra.mxu0 %v303
    %616 = vmatpush.msra.mxu0 %v287
    %617 = vmatpush.msra.mxu0 %v271
    %618 = vmatpush.msra.mxu0 %v255
    %619 = vmatpush.msra.mxu0 %v239
    %620 = vmatpush.msra.mxu0 %v223
    %621 = vmatpush.msra.mxu0 %v207
    %622 = vmatpush.msra.mxu0 %v191
    %623 = vmatpush.msra.mxu0 %v175
    %624 = vmatpush.msra.mxu0 %v159
    %625 = vmatpush.msra.mxu0 %v143
    %626 = vmatpush.msra.mxu0 %v127
    %627 = vmatmul.f32.gmra.mxu0 %v114
    %v628 = vpop.f32.mrf.mxu0
    %v629 = vadd.f32 0.0, %v628
    %630 = vdwg.mxu0
    %631 = vmatpush.msra.mxu0 %v368
    %632 = vmatpush.msra.mxu0 %v352
    %633 = vmatpush.msra.mxu0 %v336
    %634 = vmatpush.msra.mxu0 %v320
    %635 = vmatpush.msra.mxu0 %v304
    %636 = vmatpush.msra.mxu0 %v288
    %637 = vmatpush.msra.mxu0 %v272
    %638 = vmatpush.msra.mxu0 %v256
    %639 = vmatpush.msra.mxu0 %v240
    %640 = vmatpush.msra.mxu0 %v224
    %641 = vmatpush.msra.mxu0 %v208
    %642 = vmatpush.msra.mxu0 %v192
    %643 = vmatpush.msra.mxu0 %v176
    %644 = vmatpush.msra.mxu0 %v160
    %645 = vmatpush.msra.mxu0 %v144
    %646 = vmatpush.msra.mxu0 %v128
    %647 = vmatmul.f32.gmra.mxu0 %v114
    %v648 = vpop.f32.mrf.mxu0
    %v649 = vadd.f32 0.0, %v648
    %650 = vdwg.mxu0
    %651 = vmatpush.msra.mxu0 %v369
    %652 = vmatpush.msra.mxu0 %v353
    %653 = vmatpush.msra.mxu0 %v337
    %654 = vmatpush.msra.mxu0 %v321
    %655 = vmatpush.msra.mxu0 %v305
    %656 = vmatpush.msra.mxu0 %v289
    %657 = vmatpush.msra.mxu0 %v273
    %658 = vmatpush.msra.mxu0 %v257
    %659 = vmatpush.msra.mxu0 %v241
    %660 = vmatpush.msra.mxu0 %v225
    %661 = vmatpush.msra.mxu0 %v209
    %662 = vmatpush.msra.mxu0 %v193
    %663 = vmatpush.msra.mxu0 %v177
    %664 = vmatpush.msra.mxu0 %v161
    %665 = vmatpush.msra.mxu0 %v145
    %666 = vmatpush.msra.mxu0 %v129
    %667 = vmatmul.f32.gmra.mxu0 %v114
    %v668 = vpop.f32.mrf.mxu0
    %v669 = vadd.f32 0.0, %v668
    %670 = vdwg.mxu0
    %671 = vmatpush.msra.mxu0 %v370
    %672 = vmatpush.msra.mxu0 %v354
    %673 = vmatpush.msra.mxu0 %v338
    %674 = vmatpush.msra.mxu0 %v322
    %675 = vmatpush.msra.mxu0 %v306
    %676 = vmatpush.msra.mxu0 %v290
    %677 = vmatpush.msra.mxu0 %v274
    %678 = vmatpush.msra.mxu0 %v258
    %679 = vmatpush.msra.mxu0 %v242
    %680 = vmatpush.msra.mxu0 %v226
    %681 = vmatpush.msra.mxu0 %v210
    %682 = vmatpush.msra.mxu0 %v194
    %683 = vmatpush.msra.mxu0 %v178
    %684 = vmatpush.msra.mxu0 %v162
    %685 = vmatpush.msra.mxu0 %v146
    %686 = vmatpush.msra.mxu0 %v130
    %687 = vmatmul.f32.gmra.mxu0 %v114
    %v688 = vpop.f32.mrf.mxu0
    %v689 = vadd.f32 0.0, %v688
    %690 = vdwg.mxu0
    %v691 = vmax.f32 %v389, %v549
    %v692 = vmax.f32 %v409, %v569
    %v693 = vmax.f32 %v429, %v589
    %v694 = vmax.f32 %v449, %v609
    %v695 = vmax.f32 %v469, %v629
    %v696 = vmax.f32 %v489, %v649
    %v697 = vmax.f32 %v509, %v669
    %v698 = vmax.f32 %v529, %v689
    %v699 = vmax.f32 %v691, 0.0
    %v700 = vmax.f32 %v692, 0.0
    %v701 = vmax.f32 %v693, 0.0
    %v702 = vmax.f32 %v694, 0.0
    %v703 = vmax.f32 %v695, 0.0
    %v704 = vmax.f32 %v696, 0.0
    %v705 = vmax.f32 %v697, 0.0
    %v706 = vmax.f32 %v698, 0.0
    %v707 = vld [vmem:[#allocation11] sm:$0x1]
    %v708 = vld [vmem:[#allocation11 + $0x1] sm:$0x1]
    %v709 = vld [vmem:[#allocation11 + $0x2] sm:$0x1]
    %v710 = vld [vmem:[#allocation7] sm:$0xff]
    %v711 = vld [vmem:[#allocation7 + $0x8] sm:$0xff]
    %v712 = vld [vmem:[#allocation7 + $0x10] sm:$0xff]
    %v713 = vld [vmem:[#allocation7 + $0x18] sm:$0xff]
    %v714 = vld [vmem:[#allocation7 + $0x20] sm:$0xff]
    %v715 = vld [vmem:[#allocation7 + $0x28] sm:$0xff]
    %v716 = vld [vmem:[#allocation7 + $0x30] sm:$0xff]
    %v717 = vld [vmem:[#allocation7 + $0x38] sm:$0xff]
    %v718 = vld [vmem:[#allocation7 + $0x40] sm:$0xff]
    %v719 = vld [vmem:[#allocation7 + $0x48] sm:$0xff]
    %v720 = vld [vmem:[#allocation7 + $0x50] sm:$0xff]
    %v721 = vld [vmem:[#allocation7 + $0x58] sm:$0xff]
    %v722 = vld [vmem:[#allocation7 + $0x60] sm:$0xff]
    %v723 = vld [vmem:[#allocation7 + $0x68] sm:$0xff]
    %v724 = vld [vmem:[#allocation7 + $0x70] sm:$0xff]
    %v725 = vld [vmem:[#allocation7 + $0x78] sm:$0xff]
    %v726 = vld [vmem:[#allocation7 + $0x80] sm:$0xff]
    %v727 = vld [vmem:[#allocation7 + $0x88] sm:$0xff]
    %v728 = vld [vmem:[#allocation7 + $0x90] sm:$0xff]
    %v729 = vld [vmem:[#allocation7 + $0x98] sm:$0xff]
    %v730 = vld [vmem:[#allocation7 + $0xa0] sm:$0xff]
    %v731 = vld [vmem:[#allocation7 + $0xa8] sm:$0xff]
    %v732 = vld [vmem:[#allocation7 + $0xb0] sm:$0xff]
    %v733 = vld [vmem:[#allocation7 + $0xb8] sm:$0xff]
    %v734 = vld [vmem:[#allocation7 + $0xc0] sm:$0xff]
    %v735 = vld [vmem:[#allocation7 + $0xc8] sm:$0xff]
    %v736 = vld [vmem:[#allocation7 + $0xd0] sm:$0xff]
    %v737 = vld [vmem:[#allocation7 + $0xd8] sm:$0xff]
    %v738 = vld [vmem:[#allocation7 + $0xe0] sm:$0xff]
    %v739 = vld [vmem:[#allocation7 + $0xe8] sm:$0xff]
    %v740 = vld [vmem:[#allocation7 + $0xf0] sm:$0xff]
    %v741 = vld [vmem:[#allocation7 + $0xf8] sm:$0xff]
    %v742 = vld [vmem:[#allocation7 + $0x100] sm:$0xff]
    %v743 = vld [vmem:[#allocation7 + $0x108] sm:$0xff]
    %v744 = vld [vmem:[#allocation7 + $0x110] sm:$0xff]
    %v745 = vld [vmem:[#allocation7 + $0x118] sm:$0xff]
    %v746 = vld [vmem:[#allocation7 + $0x120] sm:$0xff]
    %v747 = vld [vmem:[#allocation7 + $0x128] sm:$0xff]
    %v748 = vld [vmem:[#allocation7 + $0x130] sm:$0xff]
    %v749 = vld [vmem:[#allocation7 + $0x138] sm:$0xff]
    %v750 = vld [vmem:[#allocation7 + $0x140] sm:$0xff]
    %v751 = vld [vmem:[#allocation7 + $0x148] sm:$0xff]
    %v752 = vld [vmem:[#allocation7 + $0x150] sm:$0xff]
    %v753 = vld [vmem:[#allocation7 + $0x158] sm:$0xff]
    %v754 = vld [vmem:[#allocation7 + $0x160] sm:$0xff]
    %v755 = vld [vmem:[#allocation7 + $0x168] sm:$0xff]
    %v756 = vld [vmem:[#allocation7 + $0x170] sm:$0xff]
    %v757 = vld [vmem:[#allocation7 + $0x178] sm:$0xff]
    %v758 = vld [vmem:[#allocation7 + $0x180] sm:$0xff]
    %v759 = vld [vmem:[#allocation7 + $0x188] sm:$0xff]
    %v760 = vld [vmem:[#allocation7 + $0x190] sm:$0xff]
    %v761 = vld [vmem:[#allocation7 + $0x198] sm:$0xff]
    %v762 = vld [vmem:[#allocation7 + $0x1a0] sm:$0xff]
    %v763 = vld [vmem:[#allocation7 + $0x1a8] sm:$0xff]
    %v764 = vld [vmem:[#allocation7 + $0x1b0] sm:$0xff]
    %v765 = vld [vmem:[#allocation7 + $0x1b8] sm:$0xff]
    %v766 = vld [vmem:[#allocation7 + $0x1c0] sm:$0xff]
    %v767 = vld [vmem:[#allocation7 + $0x1c8] sm:$0xff]
    %v768 = vld [vmem:[#allocation7 + $0x1d0] sm:$0xff]
    %v769 = vld [vmem:[#allocation7 + $0x1d8] sm:$0xff]
    %v770 = vld [vmem:[#allocation7 + $0x1e0] sm:$0xff]
    %v771 = vld [vmem:[#allocation7 + $0x1e8] sm:$0xff]
    %v772 = vld [vmem:[#allocation7 + $0x1f0] sm:$0xff]
    %v773 = vld [vmem:[#allocation7 + $0x1f8] sm:$0xff]
    %v774 = vld [vmem:[#allocation7 + $0x200] sm:$0xff]
    %v775 = vld [vmem:[#allocation7 + $0x208] sm:$0xff]
    %v776 = vld [vmem:[#allocation7 + $0x210] sm:$0xff]
    %v777 = vld [vmem:[#allocation7 + $0x218] sm:$0xff]
    %v778 = vld [vmem:[#allocation7 + $0x220] sm:$0xff]
    %v779 = vld [vmem:[#allocation7 + $0x228] sm:$0xff]
    %v780 = vld [vmem:[#allocation7 + $0x230] sm:$0xff]
    %v781 = vld [vmem:[#allocation7 + $0x238] sm:$0xff]
    %v782 = vld [vmem:[#allocation7 + $0x240] sm:$0xff]
    %v783 = vld [vmem:[#allocation7 + $0x248] sm:$0xff]
    %v784 = vld [vmem:[#allocation7 + $0x250] sm:$0xff]
    %v785 = vld [vmem:[#allocation7 + $0x258] sm:$0xff]
    %v786 = vld [vmem:[#allocation7 + $0x260] sm:$0xff]
    %v787 = vld [vmem:[#allocation7 + $0x268] sm:$0xff]
    %v788 = vld [vmem:[#allocation7 + $0x270] sm:$0xff]
    %v789 = vld [vmem:[#allocation7 + $0x278] sm:$0xff]
    %v790 = vld [vmem:[#allocation7 + $0x280] sm:$0xff]
    %v791 = vld [vmem:[#allocation7 + $0x288] sm:$0xff]
    %v792 = vld [vmem:[#allocation7 + $0x290] sm:$0xff]
    %v793 = vld [vmem:[#allocation7 + $0x298] sm:$0xff]
    %v794 = vld [vmem:[#allocation7 + $0x2a0] sm:$0xff]
    %v795 = vld [vmem:[#allocation7 + $0x2a8] sm:$0xff]
    %v796 = vld [vmem:[#allocation7 + $0x2b0] sm:$0xff]
    %v797 = vld [vmem:[#allocation7 + $0x2b8] sm:$0xff]
    %v798 = vld [vmem:[#allocation7 + $0x2c0] sm:$0xff]
    %v799 = vld [vmem:[#allocation7 + $0x2c8] sm:$0xff]
    %v800 = vld [vmem:[#allocation7 + $0x2d0] sm:$0xff]
    %v801 = vld [vmem:[#allocation7 + $0x2d8] sm:$0xff]
    %v802 = vld [vmem:[#allocation7 + $0x2e0] sm:$0xff]
    %v803 = vld [vmem:[#allocation7 + $0x2e8] sm:$0xff]
    %v804 = vld [vmem:[#allocation7 + $0x2f0] sm:$0xff]
    %v805 = vld [vmem:[#allocation7 + $0x2f8] sm:$0xff]
    %v806 = vld [vmem:[#allocation7 + $0x300] sm:$0xff]
    %v807 = vld [vmem:[#allocation7 + $0x308] sm:$0xff]
    %v808 = vld [vmem:[#allocation7 + $0x310] sm:$0xff]
    %v809 = vld [vmem:[#allocation7 + $0x318] sm:$0xff]
    %v810 = vld [vmem:[#allocation7 + $0x320] sm:$0xff]
    %v811 = vld [vmem:[#allocation7 + $0x328] sm:$0xff]
    %v812 = vld [vmem:[#allocation7 + $0x330] sm:$0xff]
    %v813 = vld [vmem:[#allocation7 + $0x338] sm:$0xff]
    %v814 = vld [vmem:[#allocation7 + $0x340] sm:$0xff]
    %v815 = vld [vmem:[#allocation7 + $0x348] sm:$0xff]
    %v816 = vld [vmem:[#allocation7 + $0x350] sm:$0xff]
    %v817 = vld [vmem:[#allocation7 + $0x358] sm:$0xff]
    %v818 = vld [vmem:[#allocation7 + $0x360] sm:$0xff]
    %v819 = vld [vmem:[#allocation7 + $0x368] sm:$0xff]
    %v820 = vld [vmem:[#allocation7 + $0x370] sm:$0xff]
    %v821 = vld [vmem:[#allocation7 + $0x378] sm:$0xff]
    %v822 = vld [vmem:[#allocation7 + $0x380] sm:$0xff]
    %v823 = vld [vmem:[#allocation7 + $0x388] sm:$0xff]
    %v824 = vld [vmem:[#allocation7 + $0x390] sm:$0xff]
    %v825 = vld [vmem:[#allocation7 + $0x398] sm:$0xff]
    %v826 = vld [vmem:[#allocation7 + $0x3a0] sm:$0xff]
    %v827 = vld [vmem:[#allocation7 + $0x3a8] sm:$0xff]
    %v828 = vld [vmem:[#allocation7 + $0x3b0] sm:$0xff]
    %v829 = vld [vmem:[#allocation7 + $0x3b8] sm:$0xff]
    %v830 = vld [vmem:[#allocation7 + $0x3c0] sm:$0xff]
    %v831 = vld [vmem:[#allocation7 + $0x3c8] sm:$0xff]
    %v832 = vld [vmem:[#allocation7 + $0x3d0] sm:$0xff]
    %v833 = vld [vmem:[#allocation7 + $0x3d8] sm:$0xff]
    %v834 = vld [vmem:[#allocation7 + $0x3e0] sm:$0xff]
    %v835 = vld [vmem:[#allocation7 + $0x3e8] sm:$0xff]
    %v836 = vld [vmem:[#allocation7 + $0x3f0] sm:$0xff]
    %v837 = vld [vmem:[#allocation7 + $0x3f8] sm:$0xff]
    %v838 = vperm.slane %v707, 0
    %839 = vmatpush.msra.mxu0 %v725
    %840 = vmatpush.msra.mxu0 %v724
    %841 = vmatpush.msra.mxu0 %v723
    %842 = vmatpush.msra.mxu0 %v722
    %843 = vmatpush.msra.mxu0 %v721
    %844 = vmatpush.msra.mxu0 %v720
    %845 = vmatpush.msra.mxu0 %v719
    %846 = vmatpush.msra.mxu0 %v718
    %847 = vmatpush.msra.mxu0 %v717
    %848 = vmatpush.msra.mxu0 %v716
    %849 = vmatpush.msra.mxu0 %v715
    %850 = vmatpush.msra.mxu0 %v714
    %851 = vmatpush.msra.mxu0 %v713
    %852 = vmatpush.msra.mxu0 %v712
    %853 = vmatpush.msra.mxu0 %v711
    %854 = vmatpush.msra.mxu0 %v710
    %855 = vmatmul.f32.gmra.mxu0 %v699
    %v856 = vpop.f32.mrf.mxu0
    %v857 = vadd.f32 %v838, %v856
    %858 = vdwg.mxu0
    %859 = vmatpush.msra.mxu0 %v741
    %860 = vmatpush.msra.mxu0 %v740
    %861 = vmatpush.msra.mxu0 %v739
    %862 = vmatpush.msra.mxu0 %v738
    %863 = vmatpush.msra.mxu0 %v737
    %864 = vmatpush.msra.mxu0 %v736
    %865 = vmatpush.msra.mxu0 %v735
    %866 = vmatpush.msra.mxu0 %v734
    %867 = vmatpush.msra.mxu0 %v733
    %868 = vmatpush.msra.mxu0 %v732
    %869 = vmatpush.msra.mxu0 %v731
    %870 = vmatpush.msra.mxu0 %v730
    %871 = vmatpush.msra.mxu0 %v729
    %872 = vmatpush.msra.mxu0 %v728
    %873 = vmatpush.msra.mxu0 %v727
    %874 = vmatpush.msra.mxu0 %v726
    %875 = vmatmul.f32.gmra.mxu0 %v700
    %v876 = vpop.f32.mrf.mxu0
    %v877 = vadd.f32 %v857, %v876
    %878 = vdwg.mxu0
    %879 = vmatpush.msra.mxu0 %v757
    %880 = vmatpush.msra.mxu0 %v756
    %881 = vmatpush.msra.mxu0 %v755
    %882 = vmatpush.msra.mxu0 %v754
    %883 = vmatpush.msra.mxu0 %v753
    %884 = vmatpush.msra.mxu0 %v752
    %885 = vmatpush.msra.mxu0 %v751
    %886 = vmatpush.msra.mxu0 %v750
    %887 = vmatpush.msra.mxu0 %v749
    %888 = vmatpush.msra.mxu0 %v748
    %889 = vmatpush.msra.mxu0 %v747
    %890 = vmatpush.msra.mxu0 %v746
    %891 = vmatpush.msra.mxu0 %v745
    %892 = vmatpush.msra.mxu0 %v744
    %893 = vmatpush.msra.mxu0 %v743
    %894 = vmatpush.msra.mxu0 %v742
    %895 = vmatmul.f32.gmra.mxu0 %v701
    %v896 = vpop.f32.mrf.mxu0
    %v897 = vadd.f32 %v877, %v896
    %898 = vdwg.mxu0
    %899 = vmatpush.msra.mxu0 %v773
    %900 = vmatpush.msra.mxu0 %v772
    %901 = vmatpush.msra.mxu0 %v771
    %902 = vmatpush.msra.mxu0 %v770
    %903 = vmatpush.msra.mxu0 %v769
    %904 = vmatpush.msra.mxu0 %v768
    %905 = vmatpush.msra.mxu0 %v767
    %906 = vmatpush.msra.mxu0 %v766
    %907 = vmatpush.msra.mxu0 %v765
    %908 = vmatpush.msra.mxu0 %v764
    %909 = vmatpush.msra.mxu0 %v763
    %910 = vmatpush.msra.mxu0 %v762
    %911 = vmatpush.msra.mxu0 %v761
    %912 = vmatpush.msra.mxu0 %v760
    %913 = vmatpush.msra.mxu0 %v759
    %914 = vmatpush.msra.mxu0 %v758
    %915 = vmatmul.f32.gmra.mxu0 %v702
    %v916 = vpop.f32.mrf.mxu0
    %v917 = vadd.f32 %v897, %v916
    %918 = vdwg.mxu0
    %919 = vmatpush.msra.mxu0 %v789
    %920 = vmatpush.msra.mxu0 %v788
    %921 = vmatpush.msra.mxu0 %v787
    %922 = vmatpush.msra.mxu0 %v786
    %923 = vmatpush.msra.mxu0 %v785
    %924 = vmatpush.msra.mxu0 %v784
    %925 = vmatpush.msra.mxu0 %v783
    %926 = vmatpush.msra.mxu0 %v782
    %927 = vmatpush.msra.mxu0 %v781
    %928 = vmatpush.msra.mxu0 %v780
    %929 = vmatpush.msra.mxu0 %v779
    %930 = vmatpush.msra.mxu0 %v778
    %931 = vmatpush.msra.mxu0 %v777
    %932 = vmatpush.msra.mxu0 %v776
    %933 = vmatpush.msra.mxu0 %v775
    %934 = vmatpush.msra.mxu0 %v774
    %935 = vmatmul.f32.gmra.mxu0 %v703
    %v936 = vpop.f32.mrf.mxu0
    %v937 = vadd.f32 %v917, %v936
    %938 = vdwg.mxu0
    %939 = vmatpush.msra.mxu0 %v805
    %940 = vmatpush.msra.mxu0 %v804
    %941 = vmatpush.msra.mxu0 %v803
    %942 = vmatpush.msra.mxu0 %v802
    %943 = vmatpush.msra.mxu0 %v801
    %944 = vmatpush.msra.mxu0 %v800
    %945 = vmatpush.msra.mxu0 %v799
    %946 = vmatpush.msra.mxu0 %v798
    %947 = vmatpush.msra.mxu0 %v797
    %948 = vmatpush.msra.mxu0 %v796
    %949 = vmatpush.msra.mxu0 %v795
    %950 = vmatpush.msra.mxu0 %v794
    %951 = vmatpush.msra.mxu0 %v793
    %952 = vmatpush.msra.mxu0 %v792
    %953 = vmatpush.msra.mxu0 %v791
    %954 = vmatpush.msra.mxu0 %v790
    %955 = vmatmul.f32.gmra.mxu0 %v704
    %v956 = vpop.f32.mrf.mxu0
    %v957 = vadd.f32 %v937, %v956
    %958 = vdwg.mxu0
    %959 = vmatpush.msra.mxu0 %v821
    %960 = vmatpush.msra.mxu0 %v820
    %961 = vmatpush.msra.mxu0 %v819
    %962 = vmatpush.msra.mxu0 %v818
    %963 = vmatpush.msra.mxu0 %v817
    %964 = vmatpush.msra.mxu0 %v816
    %965 = vmatpush.msra.mxu0 %v815
    %966 = vmatpush.msra.mxu0 %v814
    %967 = vmatpush.msra.mxu0 %v813
    %968 = vmatpush.msra.mxu0 %v812
    %969 = vmatpush.msra.mxu0 %v811
    %970 = vmatpush.msra.mxu0 %v810
    %971 = vmatpush.msra.mxu0 %v809
    %972 = vmatpush.msra.mxu0 %v808
    %973 = vmatpush.msra.mxu0 %v807
    %974 = vmatpush.msra.mxu0 %v806
    %975 = vmatmul.f32.gmra.mxu0 %v705
    %v976 = vpop.f32.mrf.mxu0
    %v977 = vadd.f32 %v957, %v976
    %978 = vdwg.mxu0
    %979 = vmatpush.msra.mxu0 %v837
    %980 = vmatpush.msra.mxu0 %v836
    %981 = vmatpush.msra.mxu0 %v835
    %982 = vmatpush.msra.mxu0 %v834
    %983 = vmatpush.msra.mxu0 %v833
    %984 = vmatpush.msra.mxu0 %v832
    %985 = vmatpush.msra.mxu0 %v831
    %986 = vmatpush.msra.mxu0 %v830
    %987 = vmatpush.msra.mxu0 %v829
    %988 = vmatpush.msra.mxu0 %v828
    %989 = vmatpush.msra.mxu0 %v827
    %990 = vmatpush.msra.mxu0 %v826
    %991 = vmatpush.msra.mxu0 %v825
    %992 = vmatpush.msra.mxu0 %v824
    %993 = vmatpush.msra.mxu0 %v823
    %994 = vmatpush.msra.mxu0 %v822
    %995 = vmatmul.f32.gmra.mxu0 %v706
    %v996 = vpop.f32.mrf.mxu0
    %v997 = vadd.f32 %v977, %v996
    %998 = vdwg.mxu0
    %v999 = vmax.f32 %v997, 0.0
    %v1000 = vld [vmem:[#allocation8] sm:$0xff]
    %v1001 = vld [vmem:[#allocation8 + $0x8] sm:$0xff]
    %v1002 = vld [vmem:[#allocation8 + $0x10] sm:$0xff]
    %v1003 = vld [vmem:[#allocation8 + $0x18] sm:$0xff]
    %v1004 = vld [vmem:[#allocation8 + $0x20] sm:$0xff]
    %v1005 = vld [vmem:[#allocation8 + $0x28] sm:$0xff]
    %v1006 = vld [vmem:[#allocation8 + $0x30] sm:$0xff]
    %v1007 = vld [vmem:[#allocation8 + $0x38] sm:$0xff]
    %v1008 = vld [vmem:[#allocation8 + $0x40] sm:$0xff]
    %v1009 = vld [vmem:[#allocation8 + $0x48] sm:$0xff]
    %v1010 = vld [vmem:[#allocation8 + $0x50] sm:$0xff]
    %v1011 = vld [vmem:[#allocation8 + $0x58] sm:$0xff]
    %v1012 = vld [vmem:[#allocation8 + $0x60] sm:$0xff]
    %v1013 = vld [vmem:[#allocation8 + $0x68] sm:$0xff]
    %v1014 = vld [vmem:[#allocation8 + $0x70] sm:$0xff]
    %v1015 = vld [vmem:[#allocation8 + $0x78] sm:$0xff]
    %v1016 = vperm.slane %v708, 0
    %1017 = vmatpush.msra.mxu0 %v1015
    %1018 = vmatpush.msra.mxu0 %v1014
    %1019 = vmatpush.msra.mxu0 %v1013
    %1020 = vmatpush.msra.mxu0 %v1012
    %1021 = vmatpush.msra.mxu0 %v1011
    %1022 = vmatpush.msra.mxu0 %v1010
    %1023 = vmatpush.msra.mxu0 %v1009
    %1024 = vmatpush.msra.mxu0 %v1008
    %1025 = vmatpush.msra.mxu0 %v1007
    %1026 = vmatpush.msra.mxu0 %v1006
    %1027 = vmatpush.msra.mxu0 %v1005
    %1028 = vmatpush.msra.mxu0 %v1004
    %1029 = vmatpush.msra.mxu0 %v1003
    %1030 = vmatpush.msra.mxu0 %v1002
    %1031 = vmatpush.msra.mxu0 %v1001
    %1032 = vmatpush.msra.mxu0 %v1000
    %1033 = vmatmul.f32.gmra.mxu0 %v999
    %v1034 = vpop.f32.mrf.mxu0
    %v1035 = vadd.f32 %v1016, %v1034
    %1036 = vdwg.mxu0
    %v1037 = vmax.f32 %v1035, 0.0
    %v1038 = vld [vmem:[#allocation10] sm:$0xff]
    %v1039 = vld [vmem:[#allocation10 + $0x8] sm:$0xff]
    %v1040 = vld [vmem:[#allocation10 + $0x10] sm:$0xff]
    %v1041 = vld [vmem:[#allocation10 + $0x18] sm:$0xff]
    %v1042 = vld [vmem:[#allocation10 + $0x20] sm:$0xff]
    %v1043 = vld [vmem:[#allocation10 + $0x28] sm:$0xff]
    %v1044 = vld [vmem:[#allocation10 + $0x30] sm:$0xff]
    %v1045 = vld [vmem:[#allocation10 + $0x38] sm:$0xff]
    %v1046 = vld [vmem:[#allocation10 + $0x40] sm:$0xff]
    %v1047 = vld [vmem:[#allocation10 + $0x48] sm:$0xff]
    %v1048 = vld [vmem:[#allocation10 + $0x50] sm:$0xff]
    %v1049 = vld [vmem:[#allocation10 + $0x58] sm:$0xff]
    %v1050 = vld [vmem:[#allocation10 + $0x60] sm:$0xff]
    %v1051 = vld [vmem:[#allocation10 + $0x68] sm:$0xff]
    %v1052 = vld [vmem:[#allocation10 + $0x70] sm:$0xff]
    %v1053 = vld [vmem:[#allocation10 + $0x78] sm:$0xff]
    %v1054 = vperm.slane %v709, 0
    %1055 = vmatpush.msra.mxu0 %v1053
    %1056 = vmatpush.msra.mxu0 %v1052
    %1057 = vmatpush.msra.mxu0 %v1051
    %1058 = vmatpush.msra.mxu0 %v1050
    %1059 = vmatpush.msra.mxu0 %v1049
    %1060 = vmatpush.msra.mxu0 %v1048
    %1061 = vmatpush.msra.mxu0 %v1047
    %1062 = vmatpush.msra.mxu0 %v1046
    %1063 = vmatpush.msra.mxu0 %v1045
    %1064 = vmatpush.msra.mxu0 %v1044
    %1065 = vmatpush.msra.mxu0 %v1043
    %1066 = vmatpush.msra.mxu0 %v1042
    %1067 = vmatpush.msra.mxu0 %v1041
    %1068 = vmatpush.msra.mxu0 %v1040
    %1069 = vmatpush.msra.mxu0 %v1039
    %1070 = vmatpush.msra.mxu0 %v1038
    %1071 = vmatmul.f32.gmra.mxu0 %v1037
    %v1072 = vpop.f32.mrf.mxu0
    %v1073 = vadd.f32 %v1054, %v1072
    %1074 = vdwg.mxu0
    %1075 = vst [vmem:[#allocation13] sm:$0xff] %v999
    %1076 = vst [vmem:[#allocation13 + $0x8] sm:$0xff] %v1073
    // Predicated region
    $region50: #{tpu_custom_call.1} parent=1 // pred_check
      _
    $region51: #{tpu_custom_call.1} parent=1 // pred_check_branch
      %1078 = sbr.rel (0) target = $region53
    $region52: #{tpu_custom_call.1} parent=1 // pred_region
      %1080 = vsyncadd [#allocation4], 0
      %s1082 = sshll.u32 [#allocation13], 4
      %s1083 = int_to_ptr.vmem [resolvable:$true] %s1082
      %s1084 = sshll.u32 %s6, 4
      %s1085 = int_to_ptr.hbm [resolvable:$true] %s1084
      %1087 = dma.vmem_to_hbm [thread:$0]  %s1083, 256, %s1085, [#allocation4]
    $region53: #{tpu_custom_call.1} parent=1 // pred_fallthru
      _
    // Predicated region
    $region54: #{tpu_custom_call.1} parent=1 // pred_check
      _
    $region55: #{tpu_custom_call.1} parent=1 // pred_check_branch
      %1089 = sbr.rel (0) target = $region57
    $region56: #{tpu_custom_call.1} parent=1 // pred_region
      %1091 = dma.done [#allocation4], 256
    $region57: #{tpu_custom_call.1} parent=1 // pred_fallthru
      _
    %1092 = vsyncpa [#allocation3], 1
    %1093 = vsyncpa [#allocation6], 1
    %1094 = vsyncpa [#allocation9], 1
    %1095 = vsyncpa [#allocation12], 1
    %1096 = vsyncpa [#allocation4], 1

</llo_original>
